<compile_context>
chip_gen: v6e
topology: v6e:2x2x1
jax: 0.10.0
libtpu: 0.0.40
codegen_flags: <defaults>
</compile_context>

<pallas_src>
import functools
import math

import jax
import jax.numpy as jnp
from jax.experimental import pallas as pl
from jax.experimental.pallas import tpu as pltpu

_LANE = 128
_EPS = 1e-5
_CONV_VMEM_BUDGET = 16 * 1024 * 1024   # per-step working-set target (fits all gens)
_CONV_VMEM_LIMIT = 48 * 1024 * 1024    # scoped VMEM cap (< v7x 64 MiB physical)
_GN_VMEM_BUDGET = 8 * 1024 * 1024
_GN_VMEM_LIMIT = 32 * 1024 * 1024


def _round_up(x, m):
    return (x + m - 1) // m * m


def _divisors(n):
    ds = set()
    for i in range(1, int(math.isqrt(n)) + 1):
        if n % i == 0:
            ds.add(i)
            ds.add(n // i)
    return sorted(ds)


def _pick_tile(n, per_unit_bytes, fixed_bytes, budget, pred):
    """Largest divisor d of n satisfying pred(d) whose VMEM estimate fits budget."""
    valid = [d for d in _divisors(n) if pred(d)]
    if not valid:
        return None
    fitting = [d for d in valid if fixed_bytes + d * per_unit_bytes <= budget]
    return max(fitting) if fitting else min(valid)


# ----------------------------------------------------------------------------
# Kernel 1a: direct conv (k*k shifted GEMMs) over row tiles with a halo block.
# Grid = (N, Ho // tile_ho); stats accumulate across the row-tile axis.
# ----------------------------------------------------------------------------
def _conv_rows_kernel(a_ref, halo_ref, w_ref, b_ref, y_ref, stats_ref, *,
                      k, tile_ho, wo):
    # a_ref    : (1, tile_ho, Wp, Cin_pad)  bf16  input rows [t*tile_ho, (t+1)*tile_ho)
    # halo_ref : (1, k-1,    Wp, Cin_pad)   bf16  the k-1 rows after the tile
    # w_ref    : (k*k, Cin_pad, Cout_pad)   bf16  tap order ki*k + kj
    # b_ref    : (1, Cout_pad)              f32
    # y_ref    : (1, tile_ho*wo, Cout_pad)  bf16
    # stats_ref: (1, 1, 2)                  f32   [sum, sumsq], resident across t
    x = jnp.concatenate([a_ref[0], halo_ref[0]], axis=0)   # (tile_ho+k-1, Wp, Cin)
    cin_p = x.shape[-1]
    cout_p = w_ref.shape[-1]

    acc = jnp.zeros((tile_ho * wo, cout_p), jnp.float32)
    # kj (W / sublane shift) outermost: k sublane relayouts per tile, not k*k.
    for kj in range(k):
        xw = x[:, kj:kj + wo, :]                            # (tile_ho+k-1, wo, Cin)
        for ki in range(k):
            xs = xw[ki:ki + tile_ho].reshape(tile_ho * wo, cin_p)
            acc = acc + jnp.dot(xs, w_ref[ki * k + kj],
                                preferred_element_type=jnp.float32)

    y = acc + b_ref[...]                                    # f32, (M, Cout_pad)

    @pl.when(pl.program_id(1) == 0)
    def _():
        stats_ref[...] = jnp.zeros_like(stats_ref)
    s = jnp.sum(y, keepdims=True)                           # (1, 1)
    ss = jnp.sum(y * y, keepdims=True)                      # (1, 1)
    stats_ref[0] = stats_ref[0] + jnp.concatenate([s, ss], axis=-1)

    y_ref[0] = y.astype(y_ref.dtype)


def _conv_direct(x_pad, w_taps, bias2, *, k, ho, wo, tile_ho):
    n, hp, wp, cin_p = x_pad.shape
    cout_p = w_taps.shape[-1]
    t_tiles = ho // tile_ho
    halo = k - 1
    halo_step = tile_ho // halo          # tile_ho % (k-1) == 0 by construction

    kernel = functools.partial(_conv_rows_kernel, k=k, tile_ho=tile_ho, wo=wo)
    flops = 2 * n * ho * wo * (k * k * cin_p) * cout_p
    bytes_accessed = (x_pad.size * 2 + w_taps.size * 2 + bias2.size * 4
                      + n * ho * wo * cout_p * 2 + n * 2 * 4)

    return pl.pallas_call(
        kernel,
        out_shape=(
            jax.ShapeDtypeStruct((n, ho * wo, cout_p), jnp.bfloat16),
            jax.ShapeDtypeStruct((n, 1, 2), jnp.float32),
        ),
        grid_spec=pltpu.PrefetchScalarGridSpec(
            num_scalar_prefetch=0,
            grid=(n, t_tiles),
            in_specs=[
                pl.BlockSpec((1, tile_ho, wp, cin_p), lambda i, t: (i, t, 0, 0)),
                # halo: k-1 rows starting at element row (t+1)*tile_ho
                pl.BlockSpec((1, halo, wp, cin_p),
                             lambda i, t: (i, (t + 1) * halo_step, 0, 0)),
                pl.BlockSpec((k * k, cin_p, cout_p), lambda i, t: (0, 0, 0)),
                pl.BlockSpec((1, cout_p), lambda i, t: (0, 0)),
            ],
            out_specs=[
                pl.BlockSpec((1, tile_ho * wo, cout_p), lambda i, t: (i, t, 0)),
                pl.BlockSpec((1, 1, 2), lambda i, t: (i, 0, 0)),
            ],
        ),
        compiler_params=pltpu.CompilerParams(
            dimension_semantics=("parallel", "arbitrary"),
            vmem_limit_bytes=_CONV_VMEM_LIMIT),
        cost_estimate=pl.CostEstimate(flops=flops, transcendentals=0,
                                      bytes_accessed=bytes_accessed),
    )(x_pad, x_pad, w_taps, bias2)


# ----------------------------------------------------------------------------
# Kernel 1b: packed conv (single GEMM on wrapper-side im2col, K = k*k*cin_true
# rounded to 128).  Used when cin*k*k <= 128 (no MXU waste) or stride > 1.
# ----------------------------------------------------------------------------
def _gemm_conv_kernel(x_ref, w_ref, b_ref, y_ref, stats_ref):
    # x_ref: (1, thw, K_pad) bf16 ; w_ref: (K_pad, Cout_pad) bf16 ; b_ref: (1, Cout_pad) f32
    y = jnp.dot(x_ref[0], w_ref[...], preferred_element_type=jnp.float32) + b_ref[...]

    @pl.when(pl.program_id(1) == 0)
    def _():
        stats_ref[...] = jnp.zeros_like(stats_ref)
    s = jnp.sum(y, keepdims=True)
    ss = jnp.sum(y * y, keepdims=True)
    stats_ref[0] = stats_ref[0] + jnp.concatenate([s, ss], axis=-1)

    y_ref[0] = y.astype(y_ref.dtype)


def _conv_gemm(xcol, w2d, bias2, *, thw):
    n, hw, kp = xcol.shape
    cout_p = w2d.shape[-1]
    t_tiles = hw // thw
    flops = 2 * n * hw * kp * cout_p
    bytes_accessed = (xcol.size * 2 + w2d.size * 2 + bias2.size * 4
                      + n * hw * cout_p * 2 + n * 2 * 4)
    return pl.pallas_call(
        _gemm_conv_kernel,
        out_shape=(
            jax.ShapeDtypeStruct((n, hw, cout_p), jnp.bfloat16),
            jax.ShapeDtypeStruct((n, 1, 2), jnp.float32),
        ),
        grid_spec=pltpu.PrefetchScalarGridSpec(
            num_scalar_prefetch=0,
            grid=(n, t_tiles),
            in_specs=[
                pl.BlockSpec((1, thw, kp), lambda i, t: (i, t, 0)),
                pl.BlockSpec((kp, cout_p), lambda i, t: (0, 0)),
                pl.BlockSpec((1, cout_p), lambda i, t: (0, 0)),
            ],
            out_specs=[
                pl.BlockSpec((1, thw, cout_p), lambda i, t: (i, t, 0)),
                pl.BlockSpec((1, 1, 2), lambda i, t: (i, 0, 0)),
            ],
        ),
        compiler_params=pltpu.CompilerParams(
            dimension_semantics=("parallel", "arbitrary"),
            vmem_limit_bytes=_CONV_VMEM_LIMIT),
        cost_estimate=pl.CostEstimate(flops=flops, transcendentals=0,
                                      bytes_accessed=bytes_accessed),
    )(xcol, w2d, bias2)


# ----------------------------------------------------------------------------
# Kernel 2: GroupNorm(1) normalize (folded into scale/shift) + SiLU, HW tiles.
# Grid = (N, HW // thw); both axes independent ("parallel").
# ----------------------------------------------------------------------------
def _gn_silu_kernel(y_ref, scale_ref, shift_ref, o_ref):
    # y_ref : (1, thw, Cout_pad) bf16 ; scale/shift: (1, 1, Cout_pad) f32
    z = y_ref[0].astype(jnp.float32) * scale_ref[0] + shift_ref[0]
    o_ref[0] = (z * jax.nn.sigmoid(z)).astype(o_ref.dtype)


def _gn_silu(y, scale3, shift3, *, out_dtype):
    n, hw, cout_p = y.shape
    out_bytes = jnp.dtype(out_dtype).itemsize
    per_row = cout_p * (2 * 2 + 2 * out_bytes + 4)   # bf16 in x2, out x2, f32 temp
    thw = _pick_tile(hw, per_row, 4 * cout_p * 4, _GN_VMEM_BUDGET,
                     lambda d: d % 8 == 0 or d == hw)
    return pl.pallas_call(
        _gn_silu_kernel,
        out_shape=jax.ShapeDtypeStruct((n, hw, cout_p), out_dtype),
        grid_spec=pltpu.PrefetchScalarGridSpec(
            num_scalar_prefetch=0,
            grid=(n, hw // thw),
            in_specs=[
                pl.BlockSpec((1, thw, cout_p), lambda i, t: (i, t, 0)),
                pl.BlockSpec((1, 1, cout_p), lambda i, t: (i, 0, 0)),
                pl.BlockSpec((1, 1, cout_p), lambda i, t: (i, 0, 0)),
            ],
            out_specs=pl.BlockSpec((1, thw, cout_p), lambda i, t: (i, t, 0)),
        ),
        compiler_params=pltpu.CompilerParams(
            dimension_semantics=("parallel", "parallel"),
            vmem_limit_bytes=_GN_VMEM_LIMIT),
    )(y, scale3, shift3)


# ----------------------------------------------------------------------------
# Plain-JAX glue: parameter layout, path selection, tiling, stats finalize.
# ----------------------------------------------------------------------------
def _prep_direct_weights(weight, cin_pad, cout_pad, k):
    cout, cin = weight.shape[0], weight.shape[1]
    w = jnp.transpose(weight, (2, 3, 1, 0)).reshape(k * k, cin, cout)
    w = jnp.pad(w, ((0, 0), (0, cin_pad - cin), (0, cout_pad - cout)))
    return w.astype(jnp.bfloat16)


def _prep_gemm_weights(weight, k_pad, cout_pad, k):
    cout, cin = weight.shape[0], weight.shape[1]
    w = jnp.transpose(weight, (2, 3, 1, 0)).reshape(k * k * cin, cout)
    w = jnp.pad(w, ((0, k_pad - k * k * cin), (0, cout_pad - cout)))
    return w.astype(jnp.bfloat16)


def _im2col(a, k, stride, pad, ho, wo):
    """a: (N,H,W,Cin_true) -> (N, ho*wo, k*k*Cin_true); tap order (ki, kj, c)."""
    if pad:
        a = jnp.pad(a, ((0, 0), (pad, pad), (pad, pad), (0, 0)))
    cols = []
    for ki in range(k):
        for kj in range(k):
            cols.append(a[:, ki:ki + (ho - 1) * stride + 1:stride,
                          kj:kj + (wo - 1) * stride + 1:stride, :])
    x = jnp.concatenate(cols, axis=-1)
    return x.reshape(a.shape[0], ho * wo, -1)


def _conv_block(a_nhwc, cin_true, weight, bias, gamma, beta, *,
                k, stride, pad, out_dtype):
    """One Conv2d + GroupNorm(1) + SiLU (+ identity Dropout).

    a_nhwc channels may be zero-padded beyond cin_true; padded input channels
    must be exactly zero (guaranteed by the previous block's zero gamma/beta
    padding) so that the cnt = ho*wo*cout_true GN divisor stays exact.
    """
    n, h, w_, _ = a_nhwc.shape
    cout = weight.shape[0]
    cout_pad = _round_up(cout, _LANE)
    ho = (h + 2 * pad - k) // stride + 1
    wo = (w_ + 2 * pad - k) // stride + 1

    bias2 = jnp.pad(bias, (0, cout_pad - cout)).reshape(1, cout_pad).astype(jnp.float32)

    # Direct (halo) path: stride 1 only (avoids strided VMEM slicing), and only
    # when the k^2-tap GEMMs actually fill the MXU K dimension.
    use_direct = (stride == 1 and k > 1 and cin_true * k * k > _LANE)
    tile_ho = None
    if use_direct:
        cin_pad = _round_up(cin_true, _LANE)
        wp = w_ + 2 * pad
        per_row = (wp * cin_pad * 2 * 3                    # input tile x2 bufs + concat copy
                   + wo * cout_pad * (2 * 2 + 4 + 4)       # y out x2 + f32 acc + f32 y
                   + wo * cin_pad * 2 * 2)                 # per-tap slice temporaries
        fixed = (k * k * cin_pad * cout_pad * 2 * 2        # weights (double-buffered)
                 + (k - 1) * wp * cin_pad * 2 * 3)         # halo block
        tile_ho = _pick_tile(
            ho, per_row, fixed, _CONV_VMEM_BUDGET,
            lambda d: d % (k - 1) == 0 and ((d * wo) % 8 == 0 or d == ho))
        use_direct = tile_ho is not None

    if use_direct:
        cin_pad = _round_up(cin_true, _LANE)
        x = a_nhwc
        if x.shape[-1] != cin_pad:
            x = jnp.pad(x, ((0, 0), (0, 0), (0, 0), (0, cin_pad - x.shape[-1])))
        x = jnp.pad(x.astype(jnp.bfloat16), ((0, 0), (pad, pad), (pad, pad), (0, 0)))
        w_taps = _prep_direct_weights(weight, cin_pad, cout_pad, k)
        y, stats = _conv_direct(x, w_taps, bias2, k=k, ho=ho, wo=wo, tile_ho=tile_ho)
    else:
        k_true = k * k * cin_true
        k_pad = _round_up(k_true, _LANE)
        xcol = _im2col(a_nhwc[..., :cin_true], k, stride, pad, ho, wo)
        xcol = jnp.pad(xcol, ((0, 0), (0, 0), (0, k_pad - k_true))).astype(jnp.bfloat16)
        w2d = _prep_gemm_weights(weight, k_pad, cout_pad, k)
        per_row = k_pad * 2 * 2 + cout_pad * (2 * 2 + 4 + 4)
        fixed = k_pad * cout_pad * 2 * 2
        thw = _pick_tile(ho * wo, per_row, fixed, _CONV_VMEM_BUDGET,
                         lambda d: d % 8 == 0 or d == ho * wo)
        y, stats = _conv_gemm(xcol, w2d, bias2, thw=thw)

    # Tiny per-sample finalize in XLA; fold mean/rstd + affine into scale/shift.
    cnt = float(ho * wo * cout)
    ssum = stats[:, 0, 0]
    ssq = stats[:, 0, 1]
    mean = ssum / cnt
    var = jnp.maximum(ssq / cnt - mean * mean, 0.0)
    rstd = jax.lax.rsqrt(var + _EPS)

    gamma_p = jnp.pad(gamma, (0, cout_pad - cout)).astype(jnp.float32)
    beta_p = jnp.pad(beta, (0, cout_pad - cout)).astype(jnp.float32)
    scale = gamma_p[None, :] * rstd[:, None]                # (N, Cout_pad)
    shift = beta_p[None, :] - mean[:, None] * scale         # (N, Cout_pad)

    a = _gn_silu(y, scale.reshape(n, 1, cout_pad), shift.reshape(n, 1, cout_pad),
                 out_dtype=out_dtype)
    return a.reshape(n, ho, wo, cout_pad)


@functools.partial(jax.jit, static_argnames=("k", "stride", "pad"))
def basic_conv_forward(x, params, *, k, stride, pad):
    n, cin = x.shape[0], x.shape[1]
    cout = params["w1"].shape[0]

    a = jnp.transpose(x, (0, 2, 3, 1))                      # NCHW -> NHWC once

    # Block 1: inter-block activation stays NHWC, channel-padded, bf16.
    a = _conv_block(a, cin, params["w1"], params["b1"], params["g1"], params["be1"],
                    k=k, stride=stride, pad=pad, out_dtype=jnp.bfloat16)
    # Block 2: final activation in f32.
    a = _conv_block(a, cout, params["w2"], params["b2"], params["g2"], params["be2"],
                    k=k, stride=stride, pad=pad, out_dtype=jnp.float32)

    a = a[..., :cout]                                       # drop channel padding
    return jnp.transpose(a, (0, 3, 1, 2))                   # back to NCHW


# ----------------------------------------------------------------------------
# Deterministic parameter init (shapes from BasicConv.__init__) + reference.
# ----------------------------------------------------------------------------
def init_params(key, input_dim, output_dim, k):
    k1, k2, k3, k4 = jax.random.split(key, 4)
    fan1 = input_dim * k * k
    fan2 = output_dim * k * k
    return {
        "w1": jax.random.normal(k1, (output_dim, input_dim, k, k),
                                jnp.float32) * (fan1 ** -0.5),
        "b1": jax.random.normal(k2, (output_dim,), jnp.float32) * 0.01,
        "g1": jnp.ones((output_dim,), jnp.float32),
        "be1": jnp.zeros((output_dim,), jnp.float32),
        "w2": jax.random.normal(k3, (output_dim, output_dim, k, k),
                                jnp.float32) * (fan2 ** -0.5),
        "b2": jax.random.normal(k4, (output_dim,), jnp.float32) * 0.01,
        "g2": jnp.ones((output_dim,), jnp.float32),
        "be2": jnp.zeros((output_dim,), jnp.float32),
    }


def _reference_forward(x, params, k, stride, pad):
    """Pure-JAX f32 reference of the PyTorch module (eval mode)."""
    def conv(a, w, b):
        out = jax.lax.conv_general_dilated(
            a, w, window_strides=(stride, stride),
            padding=[(pad, pad), (pad, pad)],
            dimension_numbers=("NCHW", "OIHW", "NCHW"))
        return out + b[None, :, None, None]

    def gn_silu(a, g, be):
        mean = jnp.mean(a, axis=(1, 2, 3), keepdims=True)
        var = jnp.mean((a - mean) ** 2, axis=(1, 2, 3), keepdims=True)
        z = (a - mean) * jax.lax.rsqrt(var + _EPS)
        z = z * g[None, :, None, None] + be[None, :, None, None]
        return z * jax.nn.sigmoid(z)

    a = gn_silu(conv(x, params["w1"], params["b1"]), params["g1"], params["be1"])
    a = gn_silu(conv(a, params["w2"], params["b2"]), params["g2"], params["be2"])
    return a


if __name__ == "__main__":
    K, STRIDE, PAD = 3, 1, 1
    key = jax.random.PRNGKey(0)

    configs = [
        (4, 8, 16, 16),     # small channels: packed (im2col) path for both convs
        (4, 128, 16, 16),   # packed conv1 + direct (row-tiled halo) conv2
    ]
    for cin, cout, h, w in configs:
        kx, kp, key = jax.random.split(key, 3)
        x = jax.random.normal(kx, (2, cin, h, w), jnp.float32)
        params = init_params(kp, cin, cout, K)

        out = basic_conv_forward(x, params, k=K, stride=STRIDE, pad=PAD)
        out = jax.block_until_ready(out)
        assert out.shape == (2, cout, h, w), out.shape
        assert bool(jnp.all(jnp.isfinite(out)))

        ref = _reference_forward(x, params, K, STRIDE, PAD)
        err = float(jnp.max(jnp.abs(out - ref)))
        assert err < 1e-1, f"max abs err {err}"

    print("KERNEL_OK")
</pallas_src>

<mosaic_0001>
module attributes {stable_mosaic.version = 11 : i64} {
  func.func @_gemm_conv_kernel(%arg0: i32, %arg1: i32, %arg2: memref<1x256x128xbf16, #tpu.memory_space<vmem>>, %arg3: memref<128x128xbf16, #tpu.memory_space<vmem>>, %arg4: memref<1x128xf32, #tpu.memory_space<vmem>>, %arg5: memref<1x256x128xbf16, #tpu.memory_space<vmem>>, %arg6: memref<1x1x2xf32, #tpu.memory_space<vmem>>) attributes {dimension_semantics = [#tpu.dimension_semantics<parallel>, #tpu.dimension_semantics<arbitrary>], iteration_bounds = array<i64: 2, 1>, scalar_prefetch = 0 : i64, scratch_operands = 0 : i64, tpu.core_type = #tpu.core_type<tc>, window_params = [{transform_indices = @transform_0, window_bounds = array<i64: 1, 256, 128>}, {pipeline_mode = #tpu.pipeline_mode<synchronous>, transform_indices = @transform_1, window_bounds = array<i64: 128, 128>}, {pipeline_mode = #tpu.pipeline_mode<synchronous>, transform_indices = @transform_2, window_bounds = array<i64: 1, 128>}, {transform_indices = @transform_3, window_bounds = array<i64: 1, 256, 128>}, {transform_indices = @transform_4, window_bounds = array<i64: 1, 1, 2>}]} {
    %c0 = arith.constant 0 : index
    %c0_0 = arith.constant 0 : index
    %c0_1 = arith.constant 0 : index
    %0 = vector.load %arg2[%c0, %c0_0, %c0_1] : memref<1x256x128xbf16, #tpu.memory_space<vmem>>, vector<1x256x128xbf16>
    %1 = vector.shape_cast %0 : vector<1x256x128xbf16> to vector<256x128xbf16>
    %c0_2 = arith.constant 0 : index
    %c0_3 = arith.constant 0 : index
    %2 = vector.load %arg3[%c0_2, %c0_3] : memref<128x128xbf16, #tpu.memory_space<vmem>>, vector<128x128xbf16>
    %cst = arith.constant dense<0.000000e+00> : vector<256x128xf32>
    %3 = tpu.matmul %1, %2, %cst {dimension_numbers = #tpu.dot_dimension_numbers<[1], [0], [0], [1], [0, 0, 1, 1], [], []>} : vector<256x128xbf16>, vector<128x128xbf16>, vector<256x128xf32> -> vector<256x128xf32>
    %c0_4 = arith.constant 0 : index
    %c0_5 = arith.constant 0 : index
    %4 = vector.load %arg4[%c0_4, %c0_5] : memref<1x128xf32, #tpu.memory_space<vmem>>, vector<1x128xf32>
    %5 = vector.broadcast %4 : vector<1x128xf32> to vector<256x128xf32>
    %6 = arith.addf %3, %5 : vector<256x128xf32>
    %c0_i32 = arith.constant 0 : i32
    %7 = arith.cmpi eq, %arg1, %c0_i32 : i32
    %8 = arith.extui %7 : i1 to i32
    %c0_i32_6 = arith.constant 0 : i32
    %9 = arith.cmpi ne, %8, %c0_i32_6 : i32
    scf.if %9 {
      %cst_18 = arith.constant 0.000000e+00 : f32
      %32 = vector.broadcast %cst_18 : f32 to vector<1x1x2xf32>
      %c0_19 = arith.constant 0 : index
      %c0_20 = arith.constant 0 : index
      %c0_21 = arith.constant 0 : index
      %33 = vector.load %arg6[%c0_19, %c0_20, %c0_21] : memref<1x1x2xf32, #tpu.memory_space<vmem>>, vector<1x1x2xf32>
      tpu.vector_store %arg6[%c0_19, %c0_20, %c0_21], %32 {strides = array<i32>} : memref<1x1x2xf32, #tpu.memory_space<vmem>>, vector<1x1x2xf32>,
    } else {
    }
    %10 = vector.shape_cast %6 : vector<256x128xf32> to vector<1x256x128xf32>
    %cst_7 = arith.constant dense<0.000000e+00> : vector<1xf32>
    %11 = vector.multi_reduction <add>, %10, %cst_7 [1, 2] : vector<1x256x128xf32> to vector<1xf32>
    %12 = vector.shape_cast %11 : vector<1xf32> to vector<1x1x1xf32>
    %13 = vector.extract %12[0, 0, 0] : f32 from vector<1x1x1xf32>
    %14 = vector.broadcast %13 : f32 to vector<1x1xf32>
    %15 = arith.mulf %6, %6 : vector<256x128xf32>
    %16 = vector.shape_cast %15 : vector<256x128xf32> to vector<1x256x128xf32>
    %cst_8 = arith.constant dense<0.000000e+00> : vector<1xf32>
    %17 = vector.multi_reduction <add>, %16, %cst_8 [1, 2] : vector<1x256x128xf32> to vector<1xf32>
    %18 = vector.shape_cast %17 : vector<1xf32> to vector<1x1x1xf32>
    %19 = vector.extract %18[0, 0, 0] : f32 from vector<1x1x1xf32>
    %20 = vector.broadcast %19 : f32 to vector<1x1xf32>
    %c0_9 = arith.constant 0 : index
    %c0_10 = arith.constant 0 : index
    %c0_11 = arith.constant 0 : index
    %21 = vector.load %arg6[%c0_9, %c0_10, %c0_11] : memref<1x1x2xf32, #tpu.memory_space<vmem>>, vector<1x1x2xf32>
    %22 = vector.shape_cast %21 : vector<1x1x2xf32> to vector<1x2xf32>
    %23 = tpu.concatenate %14, %20 in 1 : vector<1x1xf32>, vector<1x1xf32> -> vector<1x2xf32>
    %24 = arith.addf %22, %23 : vector<1x2xf32>
    %c0_12 = arith.constant 0 : index
    %c0_13 = arith.constant 0 : index
    %c0_14 = arith.constant 0 : index
    %25 = vector.load %arg6[%c0_12, %c0_13, %c0_14] : memref<1x1x2xf32, #tpu.memory_space<vmem>>, vector<1x1x2xf32>
    %26 = vector.shape_cast %25 : vector<1x1x2xf32> to vector<1x2xf32>
    %27 = vector.shape_cast %24 : vector<1x2xf32> to vector<1x1x2xf32>
    tpu.vector_store %arg6[%c0_12, %c0_13, %c0_14], %27 {strides = array<i32>} : memref<1x1x2xf32, #tpu.memory_space<vmem>>, vector<1x1x2xf32>,
    %28 = arith.truncf %6 : vector<256x128xf32> to vector<256x128xbf16>
    %c0_15 = arith.constant 0 : index
    %c0_16 = arith.constant 0 : index
    %c0_17 = arith.constant 0 : index
    %29 = vector.load %arg5[%c0_15, %c0_16, %c0_17] : memref<1x256x128xbf16, #tpu.memory_space<vmem>>, vector<1x256x128xbf16>
    %30 = vector.shape_cast %29 : vector<1x256x128xbf16> to vector<256x128xbf16>
    %31 = vector.shape_cast %28 : vector<256x128xbf16> to vector<1x256x128xbf16>
    tpu.vector_store %arg5[%c0_15, %c0_16, %c0_17], %31 {strides = array<i32>} : memref<1x256x128xbf16, #tpu.memory_space<vmem>>, vector<1x256x128xbf16>,
    return
  }
  func.func @transform_0(%arg0: i32, %arg1: i32) -> (i32, i32, i32) {
    %c0_i32 = arith.constant 0 : i32
    %c0_i32_0 = arith.constant 0 : i32
    return %arg0, %arg1, %c0_i32 : i32, i32, i32
  }
  func.func @transform_1(%arg0: i32, %arg1: i32) -> (i32, i32) {
    %c0_i32 = arith.constant 0 : i32
    %c0_i32_0 = arith.constant 0 : i32
    %c0_i32_1 = arith.constant 0 : i32
    return %c0_i32, %c0_i32_0 : i32, i32
  }
  func.func @transform_2(%arg0: i32, %arg1: i32) -> (i32, i32) {
    %c0_i32 = arith.constant 0 : i32
    %c0_i32_0 = arith.constant 0 : i32
    %c0_i32_1 = arith.constant 0 : i32
    return %c0_i32, %c0_i32_0 : i32, i32
  }
  func.func @transform_3(%arg0: i32, %arg1: i32) -> (i32, i32, i32) {
    %c0_i32 = arith.constant 0 : i32
    %c0_i32_0 = arith.constant 0 : i32
    return %arg0, %arg1, %c0_i32 : i32, i32, i32
  }
  func.func @transform_4(%arg0: i32, %arg1: i32) -> (i32, i32, i32) {
    %c0_i32 = arith.constant 0 : i32
    %c0_i32_0 = arith.constant 0 : i32
    %c0_i32_1 = arith.constant 0 : i32
    return %arg0, %c0_i32, %c0_i32_0 : i32, i32, i32
  }
}

module attributes {stable_mosaic.version = 11 : i64} {
  func.func @_gn_silu_kernel(%arg0: i32, %arg1: i32, %arg2: memref<1x256x128xbf16, #tpu.memory_space<vmem>>, %arg3: memref<1x1x128xf32, #tpu.memory_space<vmem>>, %arg4: memref<1x1x128xf32, #tpu.memory_space<vmem>>, %arg5: memref<1x256x128xbf16, #tpu.memory_space<vmem>>) attributes {dimension_semantics = [#tpu.dimension_semantics<parallel>, #tpu.dimension_semantics<parallel>], iteration_bounds = array<i64: 2, 1>, scalar_prefetch = 0 : i64, scratch_operands = 0 : i64, tpu.core_type = #tpu.core_type<tc>, window_params = [{transform_indices = @transform_0, window_bounds = array<i64: 1, 256, 128>}, {transform_indices = @transform_1, window_bounds = array<i64: 1, 1, 128>}, {transform_indices = @transform_2, window_bounds = array<i64: 1, 1, 128>}, {transform_indices = @transform_3, window_bounds = array<i64: 1, 256, 128>}]} {
    %c0 = arith.constant 0 : index
    %c0_0 = arith.constant 0 : index
    %c0_1 = arith.constant 0 : index
    %0 = vector.load %arg2[%c0, %c0_0, %c0_1] : memref<1x256x128xbf16, #tpu.memory_space<vmem>>, vector<1x256x128xbf16>
    %1 = vector.shape_cast %0 : vector<1x256x128xbf16> to vector<256x128xbf16>
    %2 = arith.extf %1 : vector<256x128xbf16> to vector<256x128xf32>
    %c0_2 = arith.constant 0 : index
    %c0_3 = arith.constant 0 : index
    %c0_4 = arith.constant 0 : index
    %3 = vector.load %arg3[%c0_2, %c0_3, %c0_4] : memref<1x1x128xf32, #tpu.memory_space<vmem>>, vector<1x1x128xf32>
    %4 = vector.shape_cast %3 : vector<1x1x128xf32> to vector<1x128xf32>
    %5 = vector.broadcast %4 : vector<1x128xf32> to vector<256x128xf32>
    %6 = arith.mulf %2, %5 : vector<256x128xf32>
    %c0_5 = arith.constant 0 : index
    %c0_6 = arith.constant 0 : index
    %c0_7 = arith.constant 0 : index
    %7 = vector.load %arg4[%c0_5, %c0_6, %c0_7] : memref<1x1x128xf32, #tpu.memory_space<vmem>>, vector<1x1x128xf32>
    %8 = vector.shape_cast %7 : vector<1x1x128xf32> to vector<1x128xf32>
    %9 = vector.broadcast %8 : vector<1x128xf32> to vector<256x128xf32>
    %10 = arith.addf %6, %9 : vector<256x128xf32>
    %11 = arith.negf %10 : vector<256x128xf32>
    %12 = math.exp %11 : vector<256x128xf32>
    %cst = arith.constant 1.000000e+00 : f32
    %13 = vector.broadcast %cst : f32 to vector<256x128xf32>
    %14 = arith.addf %13, %12 : vector<256x128xf32>
    %15 = arith.divf %13, %14 : vector<256x128xf32>
    %16 = arith.mulf %10, %15 : vector<256x128xf32>
    %17 = arith.truncf %16 : vector<256x128xf32> to vector<256x128xbf16>
    %c0_8 = arith.constant 0 : index
    %c0_9 = arith.constant 0 : index
    %c0_10 = arith.constant 0 : index
    %18 = vector.load %arg5[%c0_8, %c0_9, %c0_10] : memref<1x256x128xbf16, #tpu.memory_space<vmem>>, vector<1x256x128xbf16>
    %19 = vector.shape_cast %18 : vector<1x256x128xbf16> to vector<256x128xbf16>
    %20 = vector.shape_cast %17 : vector<256x128xbf16> to vector<1x256x128xbf16>
    tpu.vector_store %arg5[%c0_8, %c0_9, %c0_10], %20 {strides = array<i32>} : memref<1x256x128xbf16, #tpu.memory_space<vmem>>, vector<1x256x128xbf16>,
    return
  }
  func.func @transform_0(%arg0: i32, %arg1: i32) -> (i32, i32, i32) {
    %c0_i32 = arith.constant 0 : i32
    %c0_i32_0 = arith.constant 0 : i32
    return %arg0, %arg1, %c0_i32 : i32, i32, i32
  }
  func.func @transform_1(%arg0: i32, %arg1: i32) -> (i32, i32, i32) {
    %c0_i32 = arith.constant 0 : i32
    %c0_i32_0 = arith.constant 0 : i32
    %c0_i32_1 = arith.constant 0 : i32
    return %arg0, %c0_i32, %c0_i32_0 : i32, i32, i32
  }
  func.func @transform_2(%arg0: i32, %arg1: i32) -> (i32, i32, i32) {
    %c0_i32 = arith.constant 0 : i32
    %c0_i32_0 = arith.constant 0 : i32
    %c0_i32_1 = arith.constant 0 : i32
    return %arg0, %c0_i32, %c0_i32_0 : i32, i32, i32
  }
  func.func @transform_3(%arg0: i32, %arg1: i32) -> (i32, i32, i32) {
    %c0_i32 = arith.constant 0 : i32
    %c0_i32_0 = arith.constant 0 : i32
    return %arg0, %arg1, %c0_i32 : i32, i32, i32
  }
}

module attributes {stable_mosaic.version = 11 : i64} {
  func.func @_gn_silu_kernel(%arg0: i32, %arg1: i32, %arg2: memref<1x256x128xbf16, #tpu.memory_space<vmem>>, %arg3: memref<1x1x128xf32, #tpu.memory_space<vmem>>, %arg4: memref<1x1x128xf32, #tpu.memory_space<vmem>>, %arg5: memref<1x256x128xf32, #tpu.memory_space<vmem>>) attributes {dimension_semantics = [#tpu.dimension_semantics<parallel>, #tpu.dimension_semantics<parallel>], iteration_bounds = array<i64: 2, 1>, scalar_prefetch = 0 : i64, scratch_operands = 0 : i64, tpu.core_type = #tpu.core_type<tc>, window_params = [{transform_indices = @transform_0, window_bounds = array<i64: 1, 256, 128>}, {transform_indices = @transform_1, window_bounds = array<i64: 1, 1, 128>}, {transform_indices = @transform_2, window_bounds = array<i64: 1, 1, 128>}, {transform_indices = @transform_3, window_bounds = array<i64: 1, 256, 128>}]} {
    %c0 = arith.constant 0 : index
    %c0_0 = arith.constant 0 : index
    %c0_1 = arith.constant 0 : index
    %0 = vector.load %arg2[%c0, %c0_0, %c0_1] : memref<1x256x128xbf16, #tpu.memory_space<vmem>>, vector<1x256x128xbf16>
    %1 = vector.shape_cast %0 : vector<1x256x128xbf16> to vector<256x128xbf16>
    %2 = arith.extf %1 : vector<256x128xbf16> to vector<256x128xf32>
    %c0_2 = arith.constant 0 : index
    %c0_3 = arith.constant 0 : index
    %c0_4 = arith.constant 0 : index
    %3 = vector.load %arg3[%c0_2, %c0_3, %c0_4] : memref<1x1x128xf32, #tpu.memory_space<vmem>>, vector<1x1x128xf32>
    %4 = vector.shape_cast %3 : vector<1x1x128xf32> to vector<1x128xf32>
    %5 = vector.broadcast %4 : vector<1x128xf32> to vector<256x128xf32>
    %6 = arith.mulf %2, %5 : vector<256x128xf32>
    %c0_5 = arith.constant 0 : index
    %c0_6 = arith.constant 0 : index
    %c0_7 = arith.constant 0 : index
    %7 = vector.load %arg4[%c0_5, %c0_6, %c0_7] : memref<1x1x128xf32, #tpu.memory_space<vmem>>, vector<1x1x128xf32>
    %8 = vector.shape_cast %7 : vector<1x1x128xf32> to vector<1x128xf32>
    %9 = vector.broadcast %8 : vector<1x128xf32> to vector<256x128xf32>
    %10 = arith.addf %6, %9 : vector<256x128xf32>
    %11 = arith.negf %10 : vector<256x128xf32>
    %12 = math.exp %11 : vector<256x128xf32>
    %cst = arith.constant 1.000000e+00 : f32
    %13 = vector.broadcast %cst : f32 to vector<256x128xf32>
    %14 = arith.addf %13, %12 : vector<256x128xf32>
    %15 = arith.divf %13, %14 : vector<256x128xf32>
    %16 = arith.mulf %10, %15 : vector<256x128xf32>
    %c0_8 = arith.constant 0 : index
    %c0_9 = arith.constant 0 : index
    %c0_10 = arith.constant 0 : index
    %17 = vector.load %arg5[%c0_8, %c0_9, %c0_10] : memref<1x256x128xf32, #tpu.memory_space<vmem>>, vector<1x256x128xf32>
    %18 = vector.shape_cast %17 : vector<1x256x128xf32> to vector<256x128xf32>
    %19 = vector.shape_cast %16 : vector<256x128xf32> to vector<1x256x128xf32>
    tpu.vector_store %arg5[%c0_8, %c0_9, %c0_10], %19 {strides = array<i32>} : memref<1x256x128xf32, #tpu.memory_space<vmem>>, vector<1x256x128xf32>,
    return
  }
  func.func @transform_0(%arg0: i32, %arg1: i32) -> (i32, i32, i32) {
    %c0_i32 = arith.constant 0 : i32
    %c0_i32_0 = arith.constant 0 : i32
    return %arg0, %arg1, %c0_i32 : i32, i32, i32
  }
  func.func @transform_1(%arg0: i32, %arg1: i32) -> (i32, i32, i32) {
    %c0_i32 = arith.constant 0 : i32
    %c0_i32_0 = arith.constant 0 : i32
    %c0_i32_1 = arith.constant 0 : i32
    return %arg0, %c0_i32, %c0_i32_0 : i32, i32, i32
  }
  func.func @transform_2(%arg0: i32, %arg1: i32) -> (i32, i32, i32) {
    %c0_i32 = arith.constant 0 : i32
    %c0_i32_0 = arith.constant 0 : i32
    %c0_i32_1 = arith.constant 0 : i32
    return %arg0, %c0_i32, %c0_i32_0 : i32, i32, i32
  }
  func.func @transform_3(%arg0: i32, %arg1: i32) -> (i32, i32, i32) {
    %c0_i32 = arith.constant 0 : i32
    %c0_i32_0 = arith.constant 0 : i32
    return %arg0, %arg1, %c0_i32 : i32, i32, i32
  }
}

</mosaic_0001>

<llo_original>
// kernel: basic_conv_forward.5
$region0: #{basic_conv_forward.5}
  #allocation0 [shape = 'u32[]', space=smem, size = 0x4, offset = 0x4, fixed_abs, tag = 'smem constant byte address 0x4 - core index']
  #allocation1 [shape = 'u32[144,128]{1,0:T(1,128)}', space=vmem, size = 0x12000, scoped, tag = 'internal scratch']
  %s0 = inlined_call_operand.vmem [shape: bf16[2,256,128], index: 0, kind: input, shape index: {}]
  %s1 = inlined_call_operand.vmem [shape: f32[2,1,128], index: 1, kind: input, shape index: {}]
  %s2 = inlined_call_operand.vmem [shape: f32[2,1,128], index: 2, kind: input, shape index: {}]
  %s3 = inlined_call_operand.vmem [shape: bf16[2,256,128], index: 3, kind: output, shape index: {}]
  %s4 = sld [smem:[#allocation0]]
  $region45: #{basic_conv_forward.5} parent=0
    _
  %s6 = ssub.s32 1, %s4
  %s7 = scalar_select 0, %s6, %s4
  loop: start=0, step=1, limit=4
  $region2: #{basic_conv_forward.5} parent=0 // loop_pre_header
    _
  $region3: #{basic_conv_forward.5} parent=0 // loop_header
    %s9 = sphi 0, %s13
    %p10 = scmp.ge.s32.totalorder %s9, 4
    %s16 = sphi 0, %s28
    %s17 = sphi 0, %s24
    %s18 = sphi 0, %s16
    %s19 = sphi 0, %s17
    %s20 = sphi 0, %s18
    %s21 = sphi 0, %s19
    %s33 = sphi 0, %s35
    %s36 = sphi 0, %s33
    %s37 = sphi 0, %s36
    %s53 = sphi 0, %s37
    %s59 = sphi 0, %s61
    %s62 = sphi 0, %s59
    %s63 = sphi 0, %s62
    %s79 = sphi 0, %s63
    %s85 = sphi 0, %s87
    %s88 = sphi 0, %s85
    %s89 = sphi 0, %s88
    %s105 = sphi 0, %s89
    %s113 = sphi 0, %s115
    %s116 = sphi 0, %s113
    %s117 = sphi 0, %s116
    %s133 = sphi 0, %s117
  $region4: #{basic_conv_forward.5} parent=0 // loop_header_branch
    %12 = sbr.rel (%p10) target = $region8
  $region5: #{basic_conv_forward.5} parent=0 // loop_body
    %s14 = ssub.s32 %s9, 1
    %s15 = ssub.s32 %s9, 2
    %s22 = sadd.s32 1, %s17
    %p23 = scmp.ge.s32.totalorder %s22, 1
    %s24 = scalar_select %p23, 0, %s22
    %s25 = sadd.s32 1, %s16
    %s26 = scalar_select %p23, %s25, %s16
    %p27 = scmp.ge.s32.totalorder %s26, 2
    %s28 = scalar_select %p27, 0, %s26
    %s29 = ssub.s32 %s16, %s28
    %s30 = ssub.s32 %s17, %s24
    %s31 = sor.u32 %s29, %s30
    %p32 = scmp.eq.s32.totalorder %s31, 0
    %s34 = sadd.s32 %s33, 1
    %s35 = scalar_select %p32, %s33, %s34
    %p38 = pneg %p32
    %p39 = scmp.eq.s32.totalorder %s9, 1
    %p40 = por %p38, %p39
    %p41 = scmp.ne.s32.totalorder %s33, %s36
    %p42 = scmp.eq.s32.totalorder %s9, 0
    %p43 = por %p41, %p42
    %p44 = scmp.ne.s32.totalorder %s33, %s36
    %p45 = scmp.eq.s32.totalorder %s14, 1
    %p46 = por %p44, %p45
    %p47 = scmp.ne.s32.totalorder %s36, %s37
    %p48 = scmp.eq.s32.totalorder %s14, 0
    %p49 = por %p47, %p48
    %p50 = scmp.ne.s32.totalorder %s36, %s37
    %p51 = scmp.eq.s32.totalorder %s15, 1
    %p52 = por %p50, %p51
    %p54 = scmp.ne.s32.totalorder %s37, %s53
    %p55 = scmp.eq.s32.totalorder %s15, 0
    %p56 = por %p54, %p55
    %s57 = ssub.s32 %s16, %s28
    %p58 = scmp.eq.s32.totalorder %s57, 0
    %s60 = sadd.s32 %s59, 1
    %s61 = scalar_select %p58, %s59, %s60
    %p64 = pneg %p58
    %p65 = scmp.eq.s32.totalorder %s9, 1
    %p66 = por %p64, %p65
    %p67 = scmp.ne.s32.totalorder %s59, %s62
    %p68 = scmp.eq.s32.totalorder %s9, 0
    %p69 = por %p67, %p68
    %p70 = scmp.ne.s32.totalorder %s59, %s62
    %p71 = scmp.eq.s32.totalorder %s14, 1
    %p72 = por %p70, %p71
    %p73 = scmp.ne.s32.totalorder %s62, %s63
    %p74 = scmp.eq.s32.totalorder %s14, 0
    %p75 = por %p73, %p74
    %p76 = scmp.ne.s32.totalorder %s62, %s63
    %p77 = scmp.eq.s32.totalorder %s15, 1
    %p78 = por %p76, %p77
    %p80 = scmp.ne.s32.totalorder %s63, %s79
    %p81 = scmp.eq.s32.totalorder %s15, 0
    %p82 = por %p80, %p81
    %s83 = ssub.s32 %s16, %s28
    %p84 = scmp.eq.s32.totalorder %s83, 0
    %s86 = sadd.s32 %s85, 1
    %s87 = scalar_select %p84, %s85, %s86
    %p90 = pneg %p84
    %p91 = scmp.eq.s32.totalorder %s9, 1
    %p92 = por %p90, %p91
    %p93 = scmp.ne.s32.totalorder %s85, %s88
    %p94 = scmp.eq.s32.totalorder %s9, 0
    %p95 = por %p93, %p94
    %p96 = scmp.ne.s32.totalorder %s85, %s88
    %p97 = scmp.eq.s32.totalorder %s14, 1
    %p98 = por %p96, %p97
    %p99 = scmp.ne.s32.totalorder %s88, %s89
    %p100 = scmp.eq.s32.totalorder %s14, 0
    %p101 = por %p99, %p100
    %p102 = scmp.ne.s32.totalorder %s88, %s89
    %p103 = scmp.eq.s32.totalorder %s15, 1
    %p104 = por %p102, %p103
    %p106 = scmp.ne.s32.totalorder %s89, %s105
    %p107 = scmp.eq.s32.totalorder %s15, 0
    %p108 = por %p106, %p107
    %s109 = ssub.s32 %s16, %s28
    %s110 = ssub.s32 %s17, %s24
    %s111 = sor.u32 %s109, %s110
    %p112 = scmp.eq.s32.totalorder %s111, 0
    %s114 = sadd.s32 %s113, 1
    %s115 = scalar_select %p112, %s113, %s114
    %p118 = pneg %p112
    %p119 = scmp.eq.s32.totalorder %s9, 1
    %p120 = por %p118, %p119
    %p121 = scmp.ne.s32.totalorder %s113, %s116
    %p122 = scmp.eq.s32.totalorder %s9, 0
    %p123 = por %p121, %p122
    %p124 = scmp.ne.s32.totalorder %s113, %s116
    %p125 = scmp.eq.s32.totalorder %s14, 1
    %p126 = por %p124, %p125
    %p127 = scmp.ne.s32.totalorder %s116, %s117
    %p128 = scmp.eq.s32.totalorder %s14, 0
    %p129 = por %p127, %p128
    %p130 = scmp.ne.s32.totalorder %s116, %s117
    %p131 = scmp.eq.s32.totalorder %s15, 1
    %p132 = por %p130, %p131
    %p134 = scmp.ne.s32.totalorder %s117, %s133
    %p135 = scmp.eq.s32.totalorder %s15, 0
    %p136 = por %p134, %p135
    %p137 = scmp.le.s32.totalorder 1, %s9
    %p138 = scmp.lt.s32.totalorder %s9, 3
    %p139 = pnand %p137, %p138
    %p140 = pneg %p139
    // Predicated region
    $region9: #{basic_conv_forward.5} parent=5 // pred_check
      _
    $region10: #{basic_conv_forward.5} parent=5 // pred_check_branch
      %142 = sbr.rel (%p139) target = $region12
    $region11: #{basic_conv_forward.5} parent=5 // pred_region
      %s143 = ssub.s32 %s9, 1
    $region12: #{basic_conv_forward.5} parent=5 // pred_fallthru
      _
    %p144 = scmp.lt.s32.totalorder %s9, 2
    // Predicated region
    $region13: #{basic_conv_forward.5} parent=5 // pred_check
      %p145 = pneg %p144
    $region14: #{basic_conv_forward.5} parent=5 // pred_check_branch
      %147 = sbr.rel (%p145) target = $region16
    $region15: #{basic_conv_forward.5} parent=5 // pred_region
      // Predicated region
      $region17: #{basic_conv_forward.5} parent=15 // pred_check
        %p148 = pneg %p43
      $region18: #{basic_conv_forward.5} parent=15 // pred_check_branch
        %150 = sbr.rel (%p148) target = $region20
      $region19: #{basic_conv_forward.5} parent=15 // pred_region
        %s151 = smul.u32 32, %s17
        %p152 = scmp.lt.s32.totalorder %s16, 1
        %s153 = scalar_select %p152, %s16, 1
        %p154 = scmp.lt.s32.totalorder %s151, 31
        %s155 = scalar_select %p154, %s151, 31
        %s156 = smul.addr %s153, 32
        %s157 = sadd.s32 %s155, %s156
        %s158 = smul.addr %s157, 4
        %s159 = scalar_lea.vmem %s0, %s158
        %s160 = smul.u32 32, %s17
      $region20: #{basic_conv_forward.5} parent=15 // pred_fallthru
        _
      // Predicated region
      $region21: #{basic_conv_forward.5} parent=15 // pred_check
        %p161 = pneg %p69
      $region22: #{basic_conv_forward.5} parent=15 // pred_check_branch
        %163 = sbr.rel (%p161) target = $region24
      $region23: #{basic_conv_forward.5} parent=15 // pred_region
        %p164 = scmp.lt.s32.totalorder %s16, 1
        %s165 = scalar_select %p164, %s16, 1
        %s166 = scalar_lea.vmem %s1, %s165
      $region24: #{basic_conv_forward.5} parent=15 // pred_fallthru
        _
      // Predicated region
      $region25: #{basic_conv_forward.5} parent=15 // pred_check
        %p167 = pneg %p95
      $region26: #{basic_conv_forward.5} parent=15 // pred_check_branch
        %169 = sbr.rel (%p167) target = $region28
      $region27: #{basic_conv_forward.5} parent=15 // pred_region
        %p170 = scmp.lt.s32.totalorder %s16, 1
        %s171 = scalar_select %p170, %s16, 1
        %s172 = scalar_lea.vmem %s2, %s171
      $region28: #{basic_conv_forward.5} parent=15 // pred_fallthru
        _
    $region16: #{basic_conv_forward.5} parent=5 // pred_fallthru
      _
    %p173 = scmp.le.s32.totalorder 1, %s9
    %p174 = scmp.lt.s32.totalorder %s9, 3
    %p175 = pnand %p173, %p174
    %p176 = pneg %p175
    // Predicated region
    $region29: #{basic_conv_forward.5} parent=5 // pred_check
      _
    $region30: #{basic_conv_forward.5} parent=5 // pred_check_branch
      %178 = sbr.rel (%p175) target = $region32
    $region31: #{basic_conv_forward.5} parent=5 // pred_region
      %s179 = ssub.s32 %s9, 1
      %s180 = smul.u32 32, %s19
      %p181 = scmp.lt.s32.totalorder %s18, 1
      %s182 = scalar_select %p181, %s18, 1
      %p183 = scmp.lt.s32.totalorder %s180, 31
      %s184 = scalar_select %p183, %s180, 31
      %s185 = smul.addr %s182, 32
      %s186 = sadd.s32 %s184, %s185
      %s187 = smul.addr %s186, 4
      %s188 = scalar_lea.vmem %s0, %s187
      %p189 = pneg %p49
      %p190 = pneg %p46
      %p191 = scmp.lt.s32.totalorder %s18, 1
      %s192 = scalar_select %p191, %s18, 1
      %s193 = scalar_lea.vmem %s1, %s192
      %p194 = pneg %p75
      %p195 = pneg %p72
      %p196 = scmp.lt.s32.totalorder %s18, 1
      %s197 = scalar_select %p196, %s18, 1
      %s198 = scalar_lea.vmem %s2, %s197
      %p199 = pneg %p101
      %p200 = pneg %p98
      %p201 = pneg %p129
      %p202 = pneg %p126
      %s203 = smul.u32 32, %s19
      %p204 = scmp.lt.s32.totalorder %s18, 1
      %s205 = scalar_select %p204, %s18, 1
      %p206 = scmp.lt.s32.totalorder %s203, 31
      %s207 = scalar_select %p206, %s203, 31
      %s208 = smul.addr %s205, 32
      %s209 = sadd.s32 %s207, %s208
      %s210 = smul.addr %s209, 4
      %s211 = scalar_lea.vmem %s3, %s210
      %s212 = smul.u32 32, %s19
      %p213 = scmp.lt.s32.totalorder %s18, 1
      %s214 = scalar_select %p213, %s18, 1
      %p215 = scmp.lt.s32.totalorder %s212, 31
      %s216 = scalar_select %p215, %s212, 31
      %s217 = smul.addr %s214, 32
      %s218 = sadd.s32 %s216, %s217
      %s219 = smul.addr %s218, 4
      %s220 = scalar_lea.vmem %s0, %s219
      %s221 = smul.u32 32, %s19
      %p222 = scmp.lt.s32.totalorder %s18, 1
      %s223 = scalar_select %p222, %s18, 1
      %s224 = scalar_lea.vmem %s1, %s223
      %p225 = scmp.lt.s32.totalorder %s18, 1
      %s226 = scalar_select %p225, %s18, 1
      %s227 = scalar_lea.vmem %s2, %s226
      %s228 = smul.u32 32, %s19
      %p229 = scmp.lt.s32.totalorder %s18, 1
      %s230 = scalar_select %p229, %s18, 1
      %p231 = scmp.lt.s32.totalorder %s228, 31
      %s232 = scalar_select %p231, %s228, 31
      %s233 = smul.addr %s230, 32
      %s234 = sadd.s32 %s232, %s233
      %s235 = smul.addr %s234, 4
      %s236 = scalar_lea.vmem %s3, %s235
      %s237 = smul.u32 32, %s19
      %v238 = vld [vmem:[%s220] sm:$0xf]
      %v239 = vld [vmem:[%s220 + $0x4] sm:$0xf]
      %v240 = vld [vmem:[%s220 + $0x8] sm:$0xf]
      %v241 = vld [vmem:[%s220 + $0xc] sm:$0xf]
      %v242 = vld [vmem:[%s220 + $0x10] sm:$0xf]
      %v243 = vld [vmem:[%s220 + $0x14] sm:$0xf]
      %v244 = vld [vmem:[%s220 + $0x18] sm:$0xf]
      %v245 = vld [vmem:[%s220 + $0x1c] sm:$0xf]
      %v246 = vld [vmem:[%s220 + $0x20] sm:$0xf]
      %v247 = vld [vmem:[%s220 + $0x24] sm:$0xf]
      %v248 = vld [vmem:[%s220 + $0x28] sm:$0xf]
      %v249 = vld [vmem:[%s220 + $0x2c] sm:$0xf]
      %v250 = vld [vmem:[%s220 + $0x30] sm:$0xf]
      %v251 = vld [vmem:[%s220 + $0x34] sm:$0xf]
      %v252 = vld [vmem:[%s220 + $0x38] sm:$0xf]
      %v253 = vld [vmem:[%s220 + $0x3c] sm:$0xf]
      %v254 = vld [vmem:[%s220 + $0x40] sm:$0xf]
      %v255 = vld [vmem:[%s220 + $0x44] sm:$0xf]
      %v256 = vld [vmem:[%s220 + $0x48] sm:$0xf]
      %v257 = vld [vmem:[%s220 + $0x4c] sm:$0xf]
      %v258 = vld [vmem:[%s220 + $0x50] sm:$0xf]
      %v259 = vld [vmem:[%s220 + $0x54] sm:$0xf]
      %v260 = vld [vmem:[%s220 + $0x58] sm:$0xf]
      %v261 = vld [vmem:[%s220 + $0x5c] sm:$0xf]
      %v262 = vld [vmem:[%s220 + $0x60] sm:$0xf]
      %v263 = vld [vmem:[%s220 + $0x64] sm:$0xf]
      %v264 = vld [vmem:[%s220 + $0x68] sm:$0xf]
      %v265 = vld [vmem:[%s220 + $0x6c] sm:$0xf]
      %v266 = vld [vmem:[%s220 + $0x70] sm:$0xf]
      %v267 = vld [vmem:[%s220 + $0x74] sm:$0xf]
      %v268 = vld [vmem:[%s220 + $0x78] sm:$0xf]
      %v269 = vld [vmem:[%s220 + $0x7c] sm:$0xf]
      %v270 = vunpack.c.l.bf16 %v238
      %v271 = vunpack.c.l.bf16 %v239
      %v272 = vunpack.c.l.bf16 %v240
      %v273 = vunpack.c.l.bf16 %v241
      %v274 = vunpack.c.l.bf16 %v242
      %v275 = vunpack.c.l.bf16 %v243
      %v276 = vunpack.c.l.bf16 %v244
      %v277 = vunpack.c.l.bf16 %v245
      %v278 = vunpack.c.l.bf16 %v246
      %v279 = vunpack.c.l.bf16 %v247
      %v280 = vunpack.c.l.bf16 %v248
      %v281 = vunpack.c.l.bf16 %v249
      %v282 = vunpack.c.l.bf16 %v250
      %v283 = vunpack.c.l.bf16 %v251
      %v284 = vunpack.c.l.bf16 %v252
      %v285 = vunpack.c.l.bf16 %v253
      %v286 = vunpack.c.l.bf16 %v254
      %v287 = vunpack.c.l.bf16 %v255
      %v288 = vunpack.c.l.bf16 %v256
      %v289 = vunpack.c.l.bf16 %v257
      %v290 = vunpack.c.l.bf16 %v258
      %v291 = vunpack.c.l.bf16 %v259
      %v292 = vunpack.c.l.bf16 %v260
      %v293 = vunpack.c.l.bf16 %v261
      %v294 = vunpack.c.l.bf16 %v262
      %v295 = vunpack.c.l.bf16 %v263
      %v296 = vunpack.c.l.bf16 %v264
      %v297 = vunpack.c.l.bf16 %v265
      %v298 = vunpack.c.l.bf16 %v266
      %v299 = vunpack.c.l.bf16 %v267
      %v300 = vunpack.c.l.bf16 %v268
      %v301 = vunpack.c.l.bf16 %v269
      %v302 = vld [vmem:[%s224] sm:$0x1]
      %v304 = vlaneseq
      %v305 = vshrl.u32 %v304, 7
      %v306 = vsub.s32 0, %v305
      %v307 = vrot.slane %v302, %v306
      %v309 = vmul.f32 %v270, %v307
      %v310 = vmul.f32 %v271, %v307
      %v311 = vmul.f32 %v272, %v307
      %v312 = vmul.f32 %v273, %v307
      %v313 = vmul.f32 %v274, %v307
      %v314 = vmul.f32 %v275, %v307
      %v315 = vmul.f32 %v276, %v307
      %v316 = vmul.f32 %v277, %v307
      %v317 = vmul.f32 %v278, %v307
      %v318 = vmul.f32 %v279, %v307
      %v319 = vmul.f32 %v280, %v307
      %v320 = vmul.f32 %v281, %v307
      %v321 = vmul.f32 %v282, %v307
      %v322 = vmul.f32 %v283, %v307
      %v323 = vmul.f32 %v284, %v307
      %v324 = vmul.f32 %v285, %v307
      %v325 = vmul.f32 %v286, %v307
      %v326 = vmul.f32 %v287, %v307
      %v327 = vmul.f32 %v288, %v307
      %v328 = vmul.f32 %v289, %v307
      %v329 = vmul.f32 %v290, %v307
      %v330 = vmul.f32 %v291, %v307
      %v331 = vmul.f32 %v292, %v307
      %v332 = vmul.f32 %v293, %v307
      %v333 = vmul.f32 %v294, %v307
      %v334 = vmul.f32 %v295, %v307
      %v335 = vmul.f32 %v296, %v307
      %v336 = vmul.f32 %v297, %v307
      %v337 = vmul.f32 %v298, %v307
      %v338 = vmul.f32 %v299, %v307
      %v339 = vmul.f32 %v300, %v307
      %v340 = vmul.f32 %v301, %v307
      %v341 = vld [vmem:[%s227] sm:$0x1]
      %v343 = vlaneseq
      %v344 = vshrl.u32 %v343, 7
      %v345 = vsub.s32 0, %v344
      %v346 = vrot.slane %v341, %v345
      %v348 = vadd.f32 %v309, %v346
      %v349 = vadd.f32 %v310, %v346
      %v350 = vadd.f32 %v311, %v346
      %v351 = vadd.f32 %v312, %v346
      %v352 = vadd.f32 %v313, %v346
      %v353 = vadd.f32 %v314, %v346
      %v354 = vadd.f32 %v315, %v346
      %v355 = vadd.f32 %v316, %v346
      %v356 = vadd.f32 %v317, %v346
      %v357 = vadd.f32 %v318, %v346
      %v358 = vadd.f32 %v319, %v346
      %v359 = vadd.f32 %v320, %v346
      %v360 = vadd.f32 %v321, %v346
      %v361 = vadd.f32 %v322, %v346
      %v362 = vadd.f32 %v323, %v346
      %v363 = vadd.f32 %v324, %v346
      %v364 = vadd.f32 %v325, %v346
      %v365 = vadd.f32 %v326, %v346
      %v366 = vadd.f32 %v327, %v346
      %v367 = vadd.f32 %v328, %v346
      %v368 = vadd.f32 %v329, %v346
      %v369 = vadd.f32 %v330, %v346
      %v370 = vadd.f32 %v331, %v346
      %v371 = vadd.f32 %v332, %v346
      %v372 = vadd.f32 %v333, %v346
      %v373 = vadd.f32 %v334, %v346
      %v374 = vadd.f32 %v335, %v346
      %v375 = vadd.f32 %v336, %v346
      %v376 = vadd.f32 %v337, %v346
      %v377 = vadd.f32 %v338, %v346
      %v378 = vadd.f32 %v339, %v346
      %v379 = vadd.f32 %v340, %v346
      %v380 = vxor.u32 %v348, 2147483648
      %v381 = vxor.u32 %v349, 2147483648
      %v382 = vxor.u32 %v350, 2147483648
      %v383 = vxor.u32 %v351, 2147483648
      %v384 = vxor.u32 %v352, 2147483648
      %v385 = vxor.u32 %v353, 2147483648
      %v386 = vxor.u32 %v354, 2147483648
      %v387 = vxor.u32 %v355, 2147483648
      %v388 = vxor.u32 %v356, 2147483648
      %v389 = vxor.u32 %v357, 2147483648
      %v390 = vxor.u32 %v358, 2147483648
      %v391 = vxor.u32 %v359, 2147483648
      %v392 = vxor.u32 %v360, 2147483648
      %v393 = vxor.u32 %v361, 2147483648
      %v394 = vxor.u32 %v362, 2147483648
      %v395 = vxor.u32 %v363, 2147483648
      %v396 = vxor.u32 %v364, 2147483648
      %v397 = vxor.u32 %v365, 2147483648
      %v398 = vxor.u32 %v366, 2147483648
      %v399 = vxor.u32 %v367, 2147483648
      %v400 = vxor.u32 %v368, 2147483648
      %v401 = vxor.u32 %v369, 2147483648
      %v402 = vxor.u32 %v370, 2147483648
      %v403 = vxor.u32 %v371, 2147483648
      %v404 = vxor.u32 %v372, 2147483648
      %v405 = vxor.u32 %v373, 2147483648
      %v406 = vxor.u32 %v374, 2147483648
      %v407 = vxor.u32 %v375, 2147483648
      %v408 = vxor.u32 %v376, 2147483648
      %v409 = vxor.u32 %v377, 2147483648
      %v410 = vxor.u32 %v378, 2147483648
      %v411 = vxor.u32 %v379, 2147483648
      %v412 = vmul.f32 %v380, 1.442695
      %v413 = vpow.pop %v412
      %v414 = vmul.f32 %v381, 1.442695
      %v415 = vpow.pop %v414
      %v416 = vmul.f32 %v382, 1.442695
      %v417 = vpow.pop %v416
      %v418 = vmul.f32 %v383, 1.442695
      %v419 = vpow.pop %v418
      %v420 = vmul.f32 %v384, 1.442695
      %v421 = vpow.pop %v420
      %v422 = vmul.f32 %v385, 1.442695
      %v423 = vpow.pop %v422
      %v424 = vmul.f32 %v386, 1.442695
      %v425 = vpow.pop %v424
      %v426 = vmul.f32 %v387, 1.442695
      %v427 = vpow.pop %v426
      %v428 = vmul.f32 %v388, 1.442695
      %v429 = vpow.pop %v428
      %v430 = vmul.f32 %v389, 1.442695
      %v431 = vpow.pop %v430
      %v432 = vmul.f32 %v390, 1.442695
      %v433 = vpow.pop %v432
      %v434 = vmul.f32 %v391, 1.442695
      %v435 = vpow.pop %v434
      %v436 = vmul.f32 %v392, 1.442695
      %v437 = vpow.pop %v436
      %v438 = vmul.f32 %v393, 1.442695
      %v439 = vpow.pop %v438
      %v440 = vmul.f32 %v394, 1.442695
      %v441 = vpow.pop %v440
      %v442 = vmul.f32 %v395, 1.442695
      %v443 = vpow.pop %v442
      %v444 = vmul.f32 %v396, 1.442695
      %v445 = vpow.pop %v444
      %v446 = vmul.f32 %v397, 1.442695
      %v447 = vpow.pop %v446
      %v448 = vmul.f32 %v398, 1.442695
      %v449 = vpow.pop %v448
      %v450 = vmul.f32 %v399, 1.442695
      %v451 = vpow.pop %v450
      %v452 = vmul.f32 %v400, 1.442695
      %v453 = vpow.pop %v452
      %v454 = vmul.f32 %v401, 1.442695
      %v455 = vpow.pop %v454
      %v456 = vmul.f32 %v402, 1.442695
      %v457 = vpow.pop %v456
      %v458 = vmul.f32 %v403, 1.442695
      %v459 = vpow.pop %v458
      %v460 = vmul.f32 %v404, 1.442695
      %v461 = vpow.pop %v460
      %v462 = vmul.f32 %v405, 1.442695
      %v463 = vpow.pop %v462
      %v464 = vmul.f32 %v406, 1.442695
      %v465 = vpow.pop %v464
      %v466 = vmul.f32 %v407, 1.442695
      %v467 = vpow.pop %v466
      %v468 = vmul.f32 %v408, 1.442695
      %v469 = vpow.pop %v468
      %v470 = vmul.f32 %v409, 1.442695
      %v471 = vpow.pop %v470
      %v472 = vmul.f32 %v410, 1.442695
      %v473 = vpow.pop %v472
      %v474 = vmul.f32 %v411, 1.442695
      %v475 = vpow.pop %v474
      %v476 = vadd.f32 %v413, 1.0
      %v477 = vadd.f32 %v415, 1.0
      %v478 = vadd.f32 %v417, 1.0
      %v479 = vadd.f32 %v419, 1.0
      %v480 = vadd.f32 %v421, 1.0
      %v481 = vadd.f32 %v423, 1.0
      %v482 = vadd.f32 %v425, 1.0
      %v483 = vadd.f32 %v427, 1.0
      %v484 = vadd.f32 %v429, 1.0
      %v485 = vadd.f32 %v431, 1.0
      %v486 = vadd.f32 %v433, 1.0
      %v487 = vadd.f32 %v435, 1.0
      %v488 = vadd.f32 %v437, 1.0
      %v489 = vadd.f32 %v439, 1.0
      %v490 = vadd.f32 %v441, 1.0
      %v491 = vadd.f32 %v443, 1.0
      %v492 = vadd.f32 %v445, 1.0
      %v493 = vadd.f32 %v447, 1.0
      %v494 = vadd.f32 %v449, 1.0
      %v495 = vadd.f32 %v451, 1.0
      %v496 = vadd.f32 %v453, 1.0
      %v497 = vadd.f32 %v455, 1.0
      %v498 = vadd.f32 %v457, 1.0
      %v499 = vadd.f32 %v459, 1.0
      %v500 = vadd.f32 %v461, 1.0
      %v501 = vadd.f32 %v463, 1.0
      %v502 = vadd.f32 %v465, 1.0
      %v503 = vadd.f32 %v467, 1.0
      %v504 = vadd.f32 %v469, 1.0
      %v505 = vadd.f32 %v471, 1.0
      %v506 = vadd.f32 %v473, 1.0
      %v507 = vadd.f32 %v475, 1.0
      %v508 = vrcp.pop %v476
      %v509 = vmul.f32 1.0, %v508
      %v510 = vrcp.pop %v477
      %v511 = vmul.f32 1.0, %v510
      %v512 = vrcp.pop %v478
      %v513 = vmul.f32 1.0, %v512
      %v514 = vrcp.pop %v479
      %v515 = vmul.f32 1.0, %v514
      %v516 = vrcp.pop %v480
      %v517 = vmul.f32 1.0, %v516
      %v518 = vrcp.pop %v481
      %v519 = vmul.f32 1.0, %v518
      %v520 = vrcp.pop %v482
      %v521 = vmul.f32 1.0, %v520
      %v522 = vrcp.pop %v483
      %v523 = vmul.f32 1.0, %v522
      %v524 = vrcp.pop %v484
      %v525 = vmul.f32 1.0, %v524
      %v526 = vrcp.pop %v485
      %v527 = vmul.f32 1.0, %v526
      %v528 = vrcp.pop %v486
      %v529 = vmul.f32 1.0, %v528
      %v530 = vrcp.pop %v487
      %v531 = vmul.f32 1.0, %v530
      %v532 = vrcp.pop %v488
      %v533 = vmul.f32 1.0, %v532
      %v534 = vrcp.pop %v489
      %v535 = vmul.f32 1.0, %v534
      %v536 = vrcp.pop %v490
      %v537 = vmul.f32 1.0, %v536
      %v538 = vrcp.pop %v491
      %v539 = vmul.f32 1.0, %v538
      %v540 = vrcp.pop %v492
      %v541 = vmul.f32 1.0, %v540
      %v542 = vrcp.pop %v493
      %v543 = vmul.f32 1.0, %v542
      %v544 = vrcp.pop %v494
      %v545 = vmul.f32 1.0, %v544
      %v546 = vrcp.pop %v495
      %v547 = vmul.f32 1.0, %v546
      %v548 = vrcp.pop %v496
      %v549 = vmul.f32 1.0, %v548
      %v550 = vrcp.pop %v497
      %v551 = vmul.f32 1.0, %v550
      %v552 = vrcp.pop %v498
      %v553 = vmul.f32 1.0, %v552
      %v554 = vrcp.pop %v499
      %v555 = vmul.f32 1.0, %v554
      %v556 = vrcp.pop %v500
      %v557 = vmul.f32 1.0, %v556
      %v558 = vrcp.pop %v501
      %v559 = vmul.f32 1.0, %v558
      %v560 = vrcp.pop %v502
      %v561 = vmul.f32 1.0, %v560
      %v562 = vrcp.pop %v503
      %v563 = vmul.f32 1.0, %v562
      %v564 = vrcp.pop %v504
      %v565 = vmul.f32 1.0, %v564
      %v566 = vrcp.pop %v505
      %v567 = vmul.f32 1.0, %v566
      %v568 = vrcp.pop %v506
      %v569 = vmul.f32 1.0, %v568
      %v570 = vrcp.pop %v507
      %v571 = vmul.f32 1.0, %v570
      %v572 = vmul.f32 %v348, %v509
      %v573 = vmul.f32 %v349, %v511
      %v574 = vmul.f32 %v350, %v513
      %v575 = vmul.f32 %v351, %v515
      %v576 = vmul.f32 %v352, %v517
      %v577 = vmul.f32 %v353, %v519
      %v578 = vmul.f32 %v354, %v521
      %v579 = vmul.f32 %v355, %v523
      %v580 = vmul.f32 %v356, %v525
      %v581 = vmul.f32 %v357, %v527
      %v582 = vmul.f32 %v358, %v529
      %v583 = vmul.f32 %v359, %v531
      %v584 = vmul.f32 %v360, %v533
      %v585 = vmul.f32 %v361, %v535
      %v586 = vmul.f32 %v362, %v537
      %v587 = vmul.f32 %v363, %v539
      %v588 = vmul.f32 %v364, %v541
      %v589 = vmul.f32 %v365, %v543
      %v590 = vmul.f32 %v366, %v545
      %v591 = vmul.f32 %v367, %v547
      %v592 = vmul.f32 %v368, %v549
      %v593 = vmul.f32 %v369, %v551
      %v594 = vmul.f32 %v370, %v553
      %v595 = vmul.f32 %v371, %v555
      %v596 = vmul.f32 %v372, %v557
      %v597 = vmul.f32 %v373, %v559
      %v598 = vmul.f32 %v374, %v561
      %v599 = vmul.f32 %v375, %v563
      %v600 = vmul.f32 %v376, %v565
      %v601 = vmul.f32 %v377, %v567
      %v602 = vmul.f32 %v378, %v569
      %v603 = vmul.f32 %v379, %v571
      %v604 = vpack.c.bf16 %v573, %v572
      %v605 = vpack.c.bf16 %v575, %v574
      %v606 = vpack.c.bf16 %v577, %v576
      %v607 = vpack.c.bf16 %v579, %v578
      %v608 = vpack.c.bf16 %v581, %v580
      %v609 = vpack.c.bf16 %v583, %v582
      %v610 = vpack.c.bf16 %v585, %v584
      %v611 = vpack.c.bf16 %v587, %v586
      %v612 = vpack.c.bf16 %v589, %v588
      %v613 = vpack.c.bf16 %v591, %v590
      %v614 = vpack.c.bf16 %v593, %v592
      %v615 = vpack.c.bf16 %v595, %v594
      %v616 = vpack.c.bf16 %v597, %v596
      %v617 = vpack.c.bf16 %v599, %v598
      %v618 = vpack.c.bf16 %v601, %v600
      %v619 = vpack.c.bf16 %v603, %v602
      %v636 = vunpack.c.l.b16 %v604
      %v637 = vunpack.c.h.b16 %v604
      %v638 = vunpack.c.l.b16 %v605
      %v639 = vunpack.c.h.b16 %v605
      %v640 = vunpack.c.l.b16 %v606
      %v641 = vunpack.c.h.b16 %v606
      %v642 = vunpack.c.l.b16 %v607
      %v643 = vunpack.c.h.b16 %v607
      %v644 = vunpack.c.l.b16 %v608
      %v645 = vunpack.c.h.b16 %v608
      %v646 = vunpack.c.l.b16 %v609
      %v647 = vunpack.c.h.b16 %v609
      %v648 = vunpack.c.l.b16 %v610
      %v649 = vunpack.c.h.b16 %v610
      %v650 = vunpack.c.l.b16 %v611
      %v651 = vunpack.c.h.b16 %v611
      %v652 = vunpack.c.l.b16 %v612
      %v653 = vunpack.c.h.b16 %v612
      %v654 = vunpack.c.l.b16 %v613
      %v655 = vunpack.c.h.b16 %v613
      %v656 = vunpack.c.l.b16 %v614
      %v657 = vunpack.c.h.b16 %v614
      %v658 = vunpack.c.l.b16 %v615
      %v659 = vunpack.c.h.b16 %v615
      %v660 = vunpack.c.l.b16 %v616
      %v661 = vunpack.c.h.b16 %v616
      %v662 = vunpack.c.l.b16 %v617
      %v663 = vunpack.c.h.b16 %v617
      %v664 = vunpack.c.l.b16 %v618
      %v665 = vunpack.c.h.b16 %v618
      %v666 = vunpack.c.l.b16 %v619
      %v667 = vunpack.c.h.b16 %v619
      %v668 = vpack.c.b16 %v636, %v636
      %v669 = vpack.c.b16 %v637, %v637
      %v670 = vpack.c.b16 %v638, %v638
      %v671 = vpack.c.b16 %v639, %v639
      %v672 = vpack.c.b16 %v640, %v640
      %v673 = vpack.c.b16 %v641, %v641
      %v674 = vpack.c.b16 %v642, %v642
      %v675 = vpack.c.b16 %v643, %v643
      %v676 = vpack.c.b16 %v644, %v644
      %v677 = vpack.c.b16 %v645, %v645
      %v678 = vpack.c.b16 %v646, %v646
      %v679 = vpack.c.b16 %v647, %v647
      %v680 = vpack.c.b16 %v648, %v648
      %v681 = vpack.c.b16 %v649, %v649
      %v682 = vpack.c.b16 %v650, %v650
      %v683 = vpack.c.b16 %v651, %v651
      %v684 = vpack.c.b16 %v652, %v652
      %v685 = vpack.c.b16 %v653, %v653
      %v686 = vpack.c.b16 %v654, %v654
      %v687 = vpack.c.b16 %v655, %v655
      %v688 = vpack.c.b16 %v656, %v656
      %v689 = vpack.c.b16 %v657, %v657
      %v690 = vpack.c.b16 %v658, %v658
      %v691 = vpack.c.b16 %v659, %v659
      %v692 = vpack.c.b16 %v660, %v660
      %v693 = vpack.c.b16 %v661, %v661
      %v694 = vpack.c.b16 %v662, %v662
      %v695 = vpack.c.b16 %v663, %v663
      %v696 = vpack.c.b16 %v664, %v664
      %v697 = vpack.c.b16 %v665, %v665
      %v698 = vpack.c.b16 %v666, %v666
      %v699 = vpack.c.b16 %v667, %v667
      %732 = vst [vmem:[%s236] sm:$0xf] %v668
      %733 = vst [vmem:[%s236 + $0x4] sm:$0xf] %v669
      %734 = vst [vmem:[%s236 + $0x8] sm:$0xf] %v670
      %735 = vst [vmem:[%s236 + $0xc] sm:$0xf] %v671
      %736 = vst [vmem:[%s236 + $0x10] sm:$0xf] %v672
      %737 = vst [vmem:[%s236 + $0x14] sm:$0xf] %v673
      %738 = vst [vmem:[%s236 + $0x18] sm:$0xf] %v674
      %739 = vst [vmem:[%s236 + $0x1c] sm:$0xf] %v675
      %740 = vst [vmem:[%s236 + $0x20] sm:$0xf] %v676
      %741 = vst [vmem:[%s236 + $0x24] sm:$0xf] %v677
      %742 = vst [vmem:[%s236 + $0x28] sm:$0xf] %v678
      %743 = vst [vmem:[%s236 + $0x2c] sm:$0xf] %v679
      %744 = vst [vmem:[%s236 + $0x30] sm:$0xf] %v680
      %745 = vst [vmem:[%s236 + $0x34] sm:$0xf] %v681
      %746 = vst [vmem:[%s236 + $0x38] sm:$0xf] %v682
      %747 = vst [vmem:[%s236 + $0x3c] sm:$0xf] %v683
      %748 = vst [vmem:[%s236 + $0x40] sm:$0xf] %v684
      %749 = vst [vmem:[%s236 + $0x44] sm:$0xf] %v685
      %750 = vst [vmem:[%s236 + $0x48] sm:$0xf] %v686
      %751 = vst [vmem:[%s236 + $0x4c] sm:$0xf] %v687
      %752 = vst [vmem:[%s236 + $0x50] sm:$0xf] %v688
      %753 = vst [vmem:[%s236 + $0x54] sm:$0xf] %v689
      %754 = vst [vmem:[%s236 + $0x58] sm:$0xf] %v690
      %755 = vst [vmem:[%s236 + $0x5c] sm:$0xf] %v691
      %756 = vst [vmem:[%s236 + $0x60] sm:$0xf] %v692
      %757 = vst [vmem:[%s236 + $0x64] sm:$0xf] %v693
      %758 = vst [vmem:[%s236 + $0x68] sm:$0xf] %v694
      %759 = vst [vmem:[%s236 + $0x6c] sm:$0xf] %v695
      %760 = vst [vmem:[%s236 + $0x70] sm:$0xf] %v696
      %761 = vst [vmem:[%s236 + $0x74] sm:$0xf] %v697
      %762 = vst [vmem:[%s236 + $0x78] sm:$0xf] %v698
      %763 = vst [vmem:[%s236 + $0x7c] sm:$0xf] %v699
      %s764 = smul.u32 32, %s19
      %p765 = scmp.lt.s32.totalorder %s18, 1
      %s766 = scalar_select %p765, %s18, 1
      %p767 = scmp.lt.s32.totalorder %s764, 31
      %s768 = scalar_select %p767, %s764, 31
      %s769 = smul.addr %s766, 32
      %s770 = sadd.s32 %s768, %s769
      %s771 = smul.addr %s770, 4
      %s772 = scalar_lea.vmem %s3, %s771
      // Predicated region
      $region33: #{basic_conv_forward.5} parent=31 // pred_check
        %p773 = pneg %p126
      $region34: #{basic_conv_forward.5} parent=31 // pred_check_branch
        %775 = sbr.rel (%p773) target = $region36
      $region35: #{basic_conv_forward.5} parent=31 // pred_region
        %s776 = smul.u32 32, %s19
      $region36: #{basic_conv_forward.5} parent=31 // pred_fallthru
        _
    $region32: #{basic_conv_forward.5} parent=5 // pred_fallthru
      _
    %p777 = scmp.le.s32.totalorder 2, %s9
    // Predicated region
    $region37: #{basic_conv_forward.5} parent=5 // pred_check
      %p778 = pneg %p777
    $region38: #{basic_conv_forward.5} parent=5 // pred_check_branch
      %780 = sbr.rel (%p778) target = $region40
    $region39: #{basic_conv_forward.5} parent=5 // pred_region
      %s781 = ssub.s32 %s9, 2
      // Predicated region
      $region41: #{basic_conv_forward.5} parent=39 // pred_check
        %p782 = pneg %p132
      $region42: #{basic_conv_forward.5} parent=39 // pred_check_branch
        %784 = sbr.rel (%p782) target = $region44
      $region43: #{basic_conv_forward.5} parent=39 // pred_region
        %s785 = smul.u32 32, %s21
        %p786 = scmp.lt.s32.totalorder %s20, 1
        %s787 = scalar_select %p786, %s20, 1
        %p788 = scmp.lt.s32.totalorder %s785, 31
        %s789 = scalar_select %p788, %s785, 31
        %s790 = smul.addr %s787, 32
        %s791 = sadd.s32 %s789, %s790
        %s792 = smul.addr %s791, 4
        %s793 = scalar_lea.vmem %s3, %s792
      $region44: #{basic_conv_forward.5} parent=39 // pred_fallthru
        _
    $region40: #{basic_conv_forward.5} parent=5 // pred_fallthru
      _
  $region6: #{basic_conv_forward.5} parent=0 // loop_footer
    %s13 = sadd.s32 1, %s9
  $region7: #{basic_conv_forward.5} parent=0 // loop_footer_branch
    %8 = sbr.rel target = $region3
  $region8: #{basic_conv_forward.5} parent=0 // loop_exit
    _

// kernel: basic_conv_forward.4
$region0: #{basic_conv_forward.4}
  #allocation0 [shape = 'u32[]', space=smem, size = 0x4, offset = 0x4, fixed_abs, tag = 'smem constant byte address 0x4 - core index']
  #allocation1 [shape = 'u32[144,128]{1,0:T(1,128)}', space=vmem, size = 0x12000, scoped, tag = 'internal scratch']
  %s0 = inlined_call_operand.vmem [shape: bf16[2,256,128], index: 0, kind: input, shape index: {}]
  %s1 = inlined_call_operand.vmem [shape: bf16[128,128], index: 1, kind: input, shape index: {}]
  %s2 = inlined_call_operand.vmem [shape: f32[1,128], index: 2, kind: input, shape index: {}]
  %s3 = inlined_call_operand.vmem [shape: bf16[2,256,128], index: 3, kind: output, shape index: {0}]
  %s4 = inlined_call_operand.vmem [shape: f32[2,1,2], index: 4, kind: output, shape index: {1}]
  %5 = xla_tuple %s3, %s4
  %s6 = sld [smem:[#allocation0]]
  $region57: #{basic_conv_forward.4} parent=0
    _
  %s8 = ssub.s32 1, %s6
  %s9 = scalar_select 0, %s8, %s6
  loop: start=0, step=1, limit=4
  $region2: #{basic_conv_forward.4} parent=0 // loop_pre_header
    _
  $region3: #{basic_conv_forward.4} parent=0 // loop_header
    %s11 = sphi 0, %s15
    %p12 = scmp.ge.s32.totalorder %s11, 4
    %s18 = sphi 0, %s30
    %s19 = sphi 0, %s26
    %s20 = sphi 0, %s18
    %s21 = sphi 0, %s19
    %s22 = sphi 0, %s20
    %s23 = sphi 0, %s21
    %s35 = sphi 0, %s37
    %s38 = sphi 0, %s35
    %s39 = sphi 0, %s38
    %s55 = sphi 0, %s39
    %s59 = sphi 0, %s59
    %s61 = sphi 0, %s59
    %s62 = sphi 0, %s61
    %s76 = sphi 0, %s62
    %s80 = sphi 0, %s80
    %s82 = sphi 0, %s80
    %s83 = sphi 0, %s82
    %s97 = sphi 0, %s83
    %s105 = sphi 0, %s107
    %s108 = sphi 0, %s105
    %s109 = sphi 0, %s108
    %s125 = sphi 0, %s109
    %s131 = sphi 0, %s133
    %s134 = sphi 0, %s131
    %s135 = sphi 0, %s134
    %s151 = sphi 0, %s135
  $region4: #{basic_conv_forward.4} parent=0 // loop_header_branch
    %14 = sbr.rel (%p12) target = $region8
  $region5: #{basic_conv_forward.4} parent=0 // loop_body
    %s16 = ssub.s32 %s11, 1
    %s17 = ssub.s32 %s11, 2
    %s24 = sadd.s32 1, %s19
    %p25 = scmp.ge.s32.totalorder %s24, 1
    %s26 = scalar_select %p25, 0, %s24
    %s27 = sadd.s32 1, %s18
    %s28 = scalar_select %p25, %s27, %s18
    %p29 = scmp.ge.s32.totalorder %s28, 2
    %s30 = scalar_select %p29, 0, %s28
    %s31 = ssub.s32 %s18, %s30
    %s32 = ssub.s32 %s19, %s26
    %s33 = sor.u32 %s31, %s32
    %p34 = scmp.eq.s32.totalorder %s33, 0
    %s36 = sadd.s32 %s35, 1
    %s37 = scalar_select %p34, %s35, %s36
    %p40 = pneg %p34
    %p41 = scmp.eq.s32.totalorder %s11, 1
    %p42 = por %p40, %p41
    %p43 = scmp.ne.s32.totalorder %s35, %s38
    %p44 = scmp.eq.s32.totalorder %s11, 0
    %p45 = por %p43, %p44
    %p46 = scmp.ne.s32.totalorder %s35, %s38
    %p47 = scmp.eq.s32.totalorder %s16, 1
    %p48 = por %p46, %p47
    %p49 = scmp.ne.s32.totalorder %s38, %s39
    %p50 = scmp.eq.s32.totalorder %s16, 0
    %p51 = por %p49, %p50
    %p52 = scmp.ne.s32.totalorder %s38, %s39
    %p53 = scmp.eq.s32.totalorder %s17, 1
    %p54 = por %p52, %p53
    %p56 = scmp.ne.s32.totalorder %s39, %s55
    %p57 = scmp.eq.s32.totalorder %s17, 0
    %p58 = por %p56, %p57
    %s60 = sadd.s32 %s59, 1
    %p63 = scmp.eq.s32.totalorder %s11, 1
    %p64 = scmp.ne.s32.totalorder %s59, %s61
    %p65 = scmp.eq.s32.totalorder %s11, 0
    %p66 = por %p64, %p65
    %p67 = scmp.ne.s32.totalorder %s59, %s61
    %p68 = scmp.eq.s32.totalorder %s16, 1
    %p69 = por %p67, %p68
    %p70 = scmp.ne.s32.totalorder %s61, %s62
    %p71 = scmp.eq.s32.totalorder %s16, 0
    %p72 = por %p70, %p71
    %p73 = scmp.ne.s32.totalorder %s61, %s62
    %p74 = scmp.eq.s32.totalorder %s17, 1
    %p75 = por %p73, %p74
    %p77 = scmp.ne.s32.totalorder %s62, %s76
    %p78 = scmp.eq.s32.totalorder %s17, 0
    %p79 = por %p77, %p78
    %s81 = sadd.s32 %s80, 1
    %p84 = scmp.eq.s32.totalorder %s11, 1
    %p85 = scmp.ne.s32.totalorder %s80, %s82
    %p86 = scmp.eq.s32.totalorder %s11, 0
    %p87 = por %p85, %p86
    %p88 = scmp.ne.s32.totalorder %s80, %s82
    %p89 = scmp.eq.s32.totalorder %s16, 1
    %p90 = por %p88, %p89
    %p91 = scmp.ne.s32.totalorder %s82, %s83
    %p92 = scmp.eq.s32.totalorder %s16, 0
    %p93 = por %p91, %p92
    %p94 = scmp.ne.s32.totalorder %s82, %s83
    %p95 = scmp.eq.s32.totalorder %s17, 1
    %p96 = por %p94, %p95
    %p98 = scmp.ne.s32.totalorder %s83, %s97
    %p99 = scmp.eq.s32.totalorder %s17, 0
    %p100 = por %p98, %p99
    %s101 = ssub.s32 %s18, %s30
    %s102 = ssub.s32 %s19, %s26
    %s103 = sor.u32 %s101, %s102
    %p104 = scmp.eq.s32.totalorder %s103, 0
    %s106 = sadd.s32 %s105, 1
    %s107 = scalar_select %p104, %s105, %s106
    %p110 = pneg %p104
    %p111 = scmp.eq.s32.totalorder %s11, 1
    %p112 = por %p110, %p111
    %p113 = scmp.ne.s32.totalorder %s105, %s108
    %p114 = scmp.eq.s32.totalorder %s11, 0
    %p115 = por %p113, %p114
    %p116 = scmp.ne.s32.totalorder %s105, %s108
    %p117 = scmp.eq.s32.totalorder %s16, 1
    %p118 = por %p116, %p117
    %p119 = scmp.ne.s32.totalorder %s108, %s109
    %p120 = scmp.eq.s32.totalorder %s16, 0
    %p121 = por %p119, %p120
    %p122 = scmp.ne.s32.totalorder %s108, %s109
    %p123 = scmp.eq.s32.totalorder %s17, 1
    %p124 = por %p122, %p123
    %p126 = scmp.ne.s32.totalorder %s109, %s125
    %p127 = scmp.eq.s32.totalorder %s17, 0
    %p128 = por %p126, %p127
    %s129 = ssub.s32 %s18, %s30
    %p130 = scmp.eq.s32.totalorder %s129, 0
    %s132 = sadd.s32 %s131, 1
    %s133 = scalar_select %p130, %s131, %s132
    %p136 = pneg %p130
    %p137 = scmp.eq.s32.totalorder %s11, 1
    %p138 = por %p136, %p137
    %p139 = scmp.ne.s32.totalorder %s131, %s134
    %p140 = scmp.eq.s32.totalorder %s11, 0
    %p141 = por %p139, %p140
    %p142 = scmp.ne.s32.totalorder %s131, %s134
    %p143 = scmp.eq.s32.totalorder %s16, 1
    %p144 = por %p142, %p143
    %p145 = scmp.ne.s32.totalorder %s134, %s135
    %p146 = scmp.eq.s32.totalorder %s16, 0
    %p147 = por %p145, %p146
    %p148 = scmp.ne.s32.totalorder %s134, %s135
    %p149 = scmp.eq.s32.totalorder %s17, 1
    %p150 = por %p148, %p149
    %p152 = scmp.ne.s32.totalorder %s135, %s151
    %p153 = scmp.eq.s32.totalorder %s17, 0
    %p154 = por %p152, %p153
    %p155 = scmp.le.s32.totalorder 1, %s11
    %p156 = scmp.lt.s32.totalorder %s11, 3
    %p157 = pnand %p155, %p156
    %p158 = pneg %p157
    // Predicated region
    $region9: #{basic_conv_forward.4} parent=5 // pred_check
      _
    $region10: #{basic_conv_forward.4} parent=5 // pred_check_branch
      %160 = sbr.rel (%p157) target = $region12
    $region11: #{basic_conv_forward.4} parent=5 // pred_region
      %s161 = ssub.s32 %s11, 1
      // Predicated region
      $region13: #{basic_conv_forward.4} parent=11 // pred_check
        %p162 = pneg %p72
      $region14: #{basic_conv_forward.4} parent=11 // pred_check_branch
        %164 = sbr.rel (%p162) target = $region16
      $region15: #{basic_conv_forward.4} parent=11 // pred_region
        _
      $region16: #{basic_conv_forward.4} parent=11 // pred_fallthru
        _
      // Predicated region
      $region17: #{basic_conv_forward.4} parent=11 // pred_check
        %p165 = pneg %p93
      $region18: #{basic_conv_forward.4} parent=11 // pred_check_branch
        %167 = sbr.rel (%p165) target = $region20
      $region19: #{basic_conv_forward.4} parent=11 // pred_region
        _
      $region20: #{basic_conv_forward.4} parent=11 // pred_fallthru
        _
    $region12: #{basic_conv_forward.4} parent=5 // pred_fallthru
      _
    %p168 = scmp.lt.s32.totalorder %s11, 2
    // Predicated region
    $region21: #{basic_conv_forward.4} parent=5 // pred_check
      %p169 = pneg %p168
    $region22: #{basic_conv_forward.4} parent=5 // pred_check_branch
      %171 = sbr.rel (%p169) target = $region24
    $region23: #{basic_conv_forward.4} parent=5 // pred_region
      // Predicated region
      $region25: #{basic_conv_forward.4} parent=23 // pred_check
        %p172 = pneg %p45
      $region26: #{basic_conv_forward.4} parent=23 // pred_check_branch
        %174 = sbr.rel (%p172) target = $region28
      $region27: #{basic_conv_forward.4} parent=23 // pred_region
        %s175 = smul.u32 32, %s19
        %p176 = scmp.lt.s32.totalorder %s18, 1
        %s177 = scalar_select %p176, %s18, 1
        %p178 = scmp.lt.s32.totalorder %s175, 31
        %s179 = scalar_select %p178, %s175, 31
        %s180 = smul.addr %s177, 32
        %s181 = sadd.s32 %s179, %s180
        %s182 = smul.addr %s181, 4
        %s183 = scalar_lea.vmem %s0, %s182
        %s184 = smul.u32 32, %s19
      $region28: #{basic_conv_forward.4} parent=23 // pred_fallthru
        _
    $region24: #{basic_conv_forward.4} parent=5 // pred_fallthru
      _
    %p185 = scmp.le.s32.totalorder 1, %s11
    %p186 = scmp.lt.s32.totalorder %s11, 3
    %p187 = pnand %p185, %p186
    %p188 = pneg %p187
    // Predicated region
    $region29: #{basic_conv_forward.4} parent=5 // pred_check
      _
    $region30: #{basic_conv_forward.4} parent=5 // pred_check_branch
      %190 = sbr.rel (%p187) target = $region32
    $region31: #{basic_conv_forward.4} parent=5 // pred_region
      %s191 = ssub.s32 %s11, 1
      %s192 = smul.u32 32, %s21
      %p193 = scmp.lt.s32.totalorder %s20, 1
      %s194 = scalar_select %p193, %s20, 1
      %p195 = scmp.lt.s32.totalorder %s192, 31
      %s196 = scalar_select %p195, %s192, 31
      %s197 = smul.addr %s194, 32
      %s198 = sadd.s32 %s196, %s197
      %s199 = smul.addr %s198, 4
      %s200 = scalar_lea.vmem %s0, %s199
      %p201 = pneg %p51
      %p202 = pneg %p48
      %p203 = pneg %p72
      %p204 = pneg %p69
      %p205 = pneg %p93
      %p206 = pneg %p90
      %p207 = pneg %p121
      %p208 = pneg %p118
      %s209 = smul.u32 32, %s21
      %p210 = scmp.lt.s32.totalorder %s20, 1
      %s211 = scalar_select %p210, %s20, 1
      %p212 = scmp.lt.s32.totalorder %s209, 31
      %s213 = scalar_select %p212, %s209, 31
      %s214 = smul.addr %s211, 32
      %s215 = sadd.s32 %s213, %s214
      %s216 = smul.addr %s215, 4
      %s217 = scalar_lea.vmem %s3, %s216
      %p218 = pneg %p147
      %p219 = pneg %p144
      %p220 = scmp.lt.s32.totalorder %s20, 1
      %s221 = scalar_select %p220, %s20, 1
      %s222 = scalar_lea.vmem %s4, %s221
      %s223 = smul.u32 32, %s21
      %p224 = scmp.lt.s32.totalorder %s20, 1
      %s225 = scalar_select %p224, %s20, 1
      %p226 = scmp.lt.s32.totalorder %s223, 31
      %s227 = scalar_select %p226, %s223, 31
      %s228 = smul.addr %s225, 32
      %s229 = sadd.s32 %s227, %s228
      %s230 = smul.addr %s229, 4
      %s231 = scalar_lea.vmem %s0, %s230
      %s232 = smul.u32 32, %s21
      %s233 = smul.u32 32, %s21
      %p234 = scmp.lt.s32.totalorder %s20, 1
      %s235 = scalar_select %p234, %s20, 1
      %p236 = scmp.lt.s32.totalorder %s233, 31
      %s237 = scalar_select %p236, %s233, 31
      %s238 = smul.addr %s235, 32
      %s239 = sadd.s32 %s237, %s238
      %s240 = smul.addr %s239, 4
      %s241 = scalar_lea.vmem %s3, %s240
      %s242 = smul.u32 32, %s21
      %p243 = scmp.lt.s32.totalorder %s20, 1
      %s244 = scalar_select %p243, %s20, 1
      %s245 = scalar_lea.vmem %s4, %s244
      %v247 = vld [vmem:[%s231] sm:$0xf]
      %v248 = vld [vmem:[%s231 + $0x4] sm:$0xf]
      %v249 = vld [vmem:[%s231 + $0x8] sm:$0xf]
      %v250 = vld [vmem:[%s231 + $0xc] sm:$0xf]
      %v251 = vld [vmem:[%s231 + $0x10] sm:$0xf]
      %v252 = vld [vmem:[%s231 + $0x14] sm:$0xf]
      %v253 = vld [vmem:[%s231 + $0x18] sm:$0xf]
      %v254 = vld [vmem:[%s231 + $0x1c] sm:$0xf]
      %v255 = vld [vmem:[%s231 + $0x20] sm:$0xf]
      %v256 = vld [vmem:[%s231 + $0x24] sm:$0xf]
      %v257 = vld [vmem:[%s231 + $0x28] sm:$0xf]
      %v258 = vld [vmem:[%s231 + $0x2c] sm:$0xf]
      %v259 = vld [vmem:[%s231 + $0x30] sm:$0xf]
      %v260 = vld [vmem:[%s231 + $0x34] sm:$0xf]
      %v261 = vld [vmem:[%s231 + $0x38] sm:$0xf]
      %v262 = vld [vmem:[%s231 + $0x3c] sm:$0xf]
      %v263 = vld [vmem:[%s231 + $0x40] sm:$0xf]
      %v264 = vld [vmem:[%s231 + $0x44] sm:$0xf]
      %v265 = vld [vmem:[%s231 + $0x48] sm:$0xf]
      %v266 = vld [vmem:[%s231 + $0x4c] sm:$0xf]
      %v267 = vld [vmem:[%s231 + $0x50] sm:$0xf]
      %v268 = vld [vmem:[%s231 + $0x54] sm:$0xf]
      %v269 = vld [vmem:[%s231 + $0x58] sm:$0xf]
      %v270 = vld [vmem:[%s231 + $0x5c] sm:$0xf]
      %v271 = vld [vmem:[%s231 + $0x60] sm:$0xf]
      %v272 = vld [vmem:[%s231 + $0x64] sm:$0xf]
      %v273 = vld [vmem:[%s231 + $0x68] sm:$0xf]
      %v274 = vld [vmem:[%s231 + $0x6c] sm:$0xf]
      %v275 = vld [vmem:[%s231 + $0x70] sm:$0xf]
      %v276 = vld [vmem:[%s231 + $0x74] sm:$0xf]
      %v277 = vld [vmem:[%s231 + $0x78] sm:$0xf]
      %v278 = vld [vmem:[%s231 + $0x7c] sm:$0xf]
      %v279 = vld [vmem:[%s1] sm:$0xf]
      %v280 = vld [vmem:[%s1 + $0x4] sm:$0xf]
      %v281 = vld [vmem:[%s1 + $0x8] sm:$0xf]
      %v282 = vld [vmem:[%s1 + $0xc] sm:$0xf]
      %v283 = vld [vmem:[%s1 + $0x10] sm:$0xf]
      %v284 = vld [vmem:[%s1 + $0x14] sm:$0xf]
      %v285 = vld [vmem:[%s1 + $0x18] sm:$0xf]
      %v286 = vld [vmem:[%s1 + $0x1c] sm:$0xf]
      %v287 = vld [vmem:[%s1 + $0x20] sm:$0xf]
      %v288 = vld [vmem:[%s1 + $0x24] sm:$0xf]
      %v289 = vld [vmem:[%s1 + $0x28] sm:$0xf]
      %v290 = vld [vmem:[%s1 + $0x2c] sm:$0xf]
      %v291 = vld [vmem:[%s1 + $0x30] sm:$0xf]
      %v292 = vld [vmem:[%s1 + $0x34] sm:$0xf]
      %v293 = vld [vmem:[%s1 + $0x38] sm:$0xf]
      %v294 = vld [vmem:[%s1 + $0x3c] sm:$0xf]
      %v295 = vld [vmem:[%s2] sm:$0x1]
      %v297 = vlaneseq
      %v298 = vshrl.u32 %v297, 7
      %v299 = vsub.s32 0, %v298
      %v300 = vrot.slane %v295, %v299
      %v334 = vunpack.c.l.b16 %v247
      %v335 = vunpack.c.l.b16 %v248
      %v336 = vunpack.c.l.b16 %v249
      %v337 = vunpack.c.l.b16 %v250
      %v338 = vunpack.c.l.b16 %v251
      %v339 = vunpack.c.l.b16 %v252
      %v340 = vunpack.c.l.b16 %v253
      %v341 = vunpack.c.l.b16 %v254
      %v342 = vunpack.c.l.b16 %v255
      %v343 = vunpack.c.l.b16 %v256
      %v344 = vunpack.c.l.b16 %v257
      %v345 = vunpack.c.l.b16 %v258
      %v346 = vunpack.c.l.b16 %v259
      %v347 = vunpack.c.l.b16 %v260
      %v348 = vunpack.c.l.b16 %v261
      %v349 = vunpack.c.l.b16 %v262
      %v350 = vunpack.c.l.b16 %v263
      %v351 = vunpack.c.l.b16 %v264
      %v352 = vunpack.c.l.b16 %v265
      %v353 = vunpack.c.l.b16 %v266
      %v354 = vunpack.c.l.b16 %v267
      %v355 = vunpack.c.l.b16 %v268
      %v356 = vunpack.c.l.b16 %v269
      %v357 = vunpack.c.l.b16 %v270
      %v358 = vunpack.c.l.b16 %v271
      %v359 = vunpack.c.l.b16 %v272
      %v360 = vunpack.c.l.b16 %v273
      %v361 = vunpack.c.l.b16 %v274
      %v362 = vunpack.c.l.b16 %v275
      %v363 = vunpack.c.l.b16 %v276
      %v364 = vunpack.c.l.b16 %v277
      %v365 = vunpack.c.l.b16 %v278
      %v366 = vpack.c.b16 %v335, %v334
      %v367 = vpack.c.b16 %v337, %v336
      %v368 = vpack.c.b16 %v339, %v338
      %v369 = vpack.c.b16 %v341, %v340
      %v370 = vpack.c.b16 %v343, %v342
      %v371 = vpack.c.b16 %v345, %v344
      %v372 = vpack.c.b16 %v347, %v346
      %v373 = vpack.c.b16 %v349, %v348
      %v374 = vpack.c.b16 %v351, %v350
      %v375 = vpack.c.b16 %v353, %v352
      %v376 = vpack.c.b16 %v355, %v354
      %v377 = vpack.c.b16 %v357, %v356
      %v378 = vpack.c.b16 %v359, %v358
      %v379 = vpack.c.b16 %v361, %v360
      %v380 = vpack.c.b16 %v363, %v362
      %v381 = vpack.c.b16 %v365, %v364
      %v414 = vunpack.c.l.b16 %v279
      %v415 = vunpack.c.l.b16 %v280
      %v416 = vunpack.c.l.b16 %v281
      %v417 = vunpack.c.l.b16 %v282
      %v418 = vunpack.c.l.b16 %v283
      %v419 = vunpack.c.l.b16 %v284
      %v420 = vunpack.c.l.b16 %v285
      %v421 = vunpack.c.l.b16 %v286
      %v422 = vunpack.c.l.b16 %v287
      %v423 = vunpack.c.l.b16 %v288
      %v424 = vunpack.c.l.b16 %v289
      %v425 = vunpack.c.l.b16 %v290
      %v426 = vunpack.c.l.b16 %v291
      %v427 = vunpack.c.l.b16 %v292
      %v428 = vunpack.c.l.b16 %v293
      %v429 = vunpack.c.l.b16 %v294
      %v430 = vpack.c.b16 %v415, %v414
      %v431 = vpack.c.b16 %v417, %v416
      %v432 = vpack.c.b16 %v419, %v418
      %v433 = vpack.c.b16 %v421, %v420
      %v434 = vpack.c.b16 %v423, %v422
      %v435 = vpack.c.b16 %v425, %v424
      %v436 = vpack.c.b16 %v427, %v426
      %v437 = vpack.c.b16 %v429, %v428
      %446 = vmatprep.subr.bf16.mxu0 0
      %447 = vmatpush1.bf16.msra.mxu0 %v437
      %448 = vmatprep.subr.bf16.mxu0 0
      %449 = vmatpush1.bf16.msra.mxu0 %v436
      %450 = vmatprep.subr.bf16.mxu0 0
      %451 = vmatpush1.bf16.msra.mxu0 %v435
      %452 = vmatprep.subr.bf16.mxu0 0
      %453 = vmatpush1.bf16.msra.mxu0 %v434
      %454 = vmatprep.subr.bf16.mxu0 0
      %455 = vmatpush1.bf16.msra.mxu0 %v433
      %456 = vmatprep.subr.bf16.mxu0 0
      %457 = vmatpush1.bf16.msra.mxu0 %v432
      %458 = vmatprep.subr.bf16.mxu0 0
      %459 = vmatpush1.bf16.msra.mxu0 %v431
      %460 = vmatprep.subr.bf16.mxu0 0
      %461 = vmatpush1.bf16.msra.mxu0 %v430
      %462 = vmatprep.subr.bf16.mxu0 0
      %463 = vmatpush2.bf16.msra.mxu0 0
      %464 = vmatprep.subr.bf16.mxu0 0
      %465 = vmatpush2.bf16.msra.mxu0 0
      %466 = vmatprep.subr.bf16.mxu0 0
      %467 = vmatpush2.bf16.msra.mxu0 0
      %468 = vmatprep.subr.bf16.mxu0 0
      %469 = vmatpush2.bf16.msra.mxu0 0
      %470 = vmatprep.subr.bf16.mxu0 0
      %471 = vmatpush2.bf16.msra.mxu0 0
      %472 = vmatprep.subr.bf16.mxu0 0
      %473 = vmatpush2.bf16.msra.mxu0 0
      %474 = vmatprep.subr.bf16.mxu0 0
      %475 = vmatpush2.bf16.msra.mxu0 0
      %476 = vmatprep.subr.bf16.mxu0 0
      %477 = vmatpush2.bf16.msra.mxu0 0
      %478 = vmatprep.mubr.bf16.mxu0 0
      %479 = vmatmul.mubr.bf16.gmra.mxu0 %v366
      %v480 = vpop.f32.mrf.mxu0
      %v481 = vadd.f32 %v300, %v480
      %v482 = vpop.f32.mrf.mxu0
      %v483 = vpop.f32.mrf.mxu0
      %v484 = vadd.f32 %v300, %v483
      %v485 = vpop.f32.mrf.mxu0
      %486 = vmatprep.mubr.bf16.mxu0 0
      %487 = vmatmul.mubr.bf16.gmra.mxu0 %v367
      %v488 = vpop.f32.mrf.mxu0
      %v489 = vadd.f32 %v300, %v488
      %v490 = vpop.f32.mrf.mxu0
      %v491 = vpop.f32.mrf.mxu0
      %v492 = vadd.f32 %v300, %v491
      %v493 = vpop.f32.mrf.mxu0
      %494 = vmatprep.mubr.bf16.mxu0 0
      %495 = vmatmul.mubr.bf16.gmra.mxu0 %v368
      %v496 = vpop.f32.mrf.mxu0
      %v497 = vadd.f32 %v300, %v496
      %v498 = vpop.f32.mrf.mxu0
      %v499 = vpop.f32.mrf.mxu0
      %v500 = vadd.f32 %v300, %v499
      %v501 = vpop.f32.mrf.mxu0
      %502 = vmatprep.mubr.bf16.mxu0 0
      %503 = vmatmul.mubr.bf16.gmra.mxu0 %v369
      %v504 = vpop.f32.mrf.mxu0
      %v505 = vadd.f32 %v300, %v504
      %v506 = vpop.f32.mrf.mxu0
      %v507 = vpop.f32.mrf.mxu0
      %v508 = vadd.f32 %v300, %v507
      %v509 = vpop.f32.mrf.mxu0
      %510 = vmatprep.mubr.bf16.mxu0 0
      %511 = vmatmul.mubr.bf16.gmra.mxu0 %v370
      %v512 = vpop.f32.mrf.mxu0
      %v513 = vadd.f32 %v300, %v512
      %v514 = vpop.f32.mrf.mxu0
      %v515 = vpop.f32.mrf.mxu0
      %v516 = vadd.f32 %v300, %v515
      %v517 = vpop.f32.mrf.mxu0
      %518 = vmatprep.mubr.bf16.mxu0 0
      %519 = vmatmul.mubr.bf16.gmra.mxu0 %v371
      %v520 = vpop.f32.mrf.mxu0
      %v521 = vadd.f32 %v300, %v520
      %v522 = vpop.f32.mrf.mxu0
      %v523 = vpop.f32.mrf.mxu0
      %v524 = vadd.f32 %v300, %v523
      %v525 = vpop.f32.mrf.mxu0
      %526 = vmatprep.mubr.bf16.mxu0 0
      %527 = vmatmul.mubr.bf16.gmra.mxu0 %v372
      %v528 = vpop.f32.mrf.mxu0
      %v529 = vadd.f32 %v300, %v528
      %v530 = vpop.f32.mrf.mxu0
      %v531 = vpop.f32.mrf.mxu0
      %v532 = vadd.f32 %v300, %v531
      %v533 = vpop.f32.mrf.mxu0
      %534 = vmatprep.mubr.bf16.mxu0 0
      %535 = vmatmul.mubr.bf16.gmra.mxu0 %v373
      %v536 = vpop.f32.mrf.mxu0
      %v537 = vadd.f32 %v300, %v536
      %v538 = vpop.f32.mrf.mxu0
      %v539 = vpop.f32.mrf.mxu0
      %v540 = vadd.f32 %v300, %v539
      %v541 = vpop.f32.mrf.mxu0
      %542 = vmatprep.mubr.bf16.mxu0 0
      %543 = vmatmul.mubr.bf16.gmra.mxu0 %v374
      %v544 = vpop.f32.mrf.mxu0
      %v545 = vadd.f32 %v300, %v544
      %v546 = vpop.f32.mrf.mxu0
      %v547 = vpop.f32.mrf.mxu0
      %v548 = vadd.f32 %v300, %v547
      %v549 = vpop.f32.mrf.mxu0
      %550 = vmatprep.mubr.bf16.mxu0 0
      %551 = vmatmul.mubr.bf16.gmra.mxu0 %v375
      %v552 = vpop.f32.mrf.mxu0
      %v553 = vadd.f32 %v300, %v552
      %v554 = vpop.f32.mrf.mxu0
      %v555 = vpop.f32.mrf.mxu0
      %v556 = vadd.f32 %v300, %v555
      %v557 = vpop.f32.mrf.mxu0
      %558 = vmatprep.mubr.bf16.mxu0 0
      %559 = vmatmul.mubr.bf16.gmra.mxu0 %v376
      %v560 = vpop.f32.mrf.mxu0
      %v561 = vadd.f32 %v300, %v560
      %v562 = vpop.f32.mrf.mxu0
      %v563 = vpop.f32.mrf.mxu0
      %v564 = vadd.f32 %v300, %v563
      %v565 = vpop.f32.mrf.mxu0
      %566 = vmatprep.mubr.bf16.mxu0 0
      %567 = vmatmul.mubr.bf16.gmra.mxu0 %v377
      %v568 = vpop.f32.mrf.mxu0
      %v569 = vadd.f32 %v300, %v568
      %v570 = vpop.f32.mrf.mxu0
      %v571 = vpop.f32.mrf.mxu0
      %v572 = vadd.f32 %v300, %v571
      %v573 = vpop.f32.mrf.mxu0
      %574 = vmatprep.mubr.bf16.mxu0 0
      %575 = vmatmul.mubr.bf16.gmra.mxu0 %v378
      %v576 = vpop.f32.mrf.mxu0
      %v577 = vadd.f32 %v300, %v576
      %v578 = vpop.f32.mrf.mxu0
      %v579 = vpop.f32.mrf.mxu0
      %v580 = vadd.f32 %v300, %v579
      %v581 = vpop.f32.mrf.mxu0
      %582 = vmatprep.mubr.bf16.mxu0 0
      %583 = vmatmul.mubr.bf16.gmra.mxu0 %v379
      %v584 = vpop.f32.mrf.mxu0
      %v585 = vadd.f32 %v300, %v584
      %v586 = vpop.f32.mrf.mxu0
      %v587 = vpop.f32.mrf.mxu0
      %v588 = vadd.f32 %v300, %v587
      %v589 = vpop.f32.mrf.mxu0
      %590 = vmatprep.mubr.bf16.mxu0 0
      %591 = vmatmul.mubr.bf16.gmra.mxu0 %v380
      %v592 = vpop.f32.mrf.mxu0
      %v593 = vadd.f32 %v300, %v592
      %v594 = vpop.f32.mrf.mxu0
      %v595 = vpop.f32.mrf.mxu0
      %v596 = vadd.f32 %v300, %v595
      %v597 = vpop.f32.mrf.mxu0
      %598 = vmatprep.mubr.bf16.mxu0 0
      %599 = vmatmul.mubr.bf16.gmra.mxu0 %v381
      %v600 = vpop.f32.mrf.mxu0
      %v601 = vadd.f32 %v300, %v600
      %v602 = vpop.f32.mrf.mxu0
      %v603 = vpop.f32.mrf.mxu0
      %v604 = vadd.f32 %v300, %v603
      %v605 = vpop.f32.mrf.mxu0
      %606 = vdwg.mxu0
      %p607 = scmp.eq.s32.totalorder %s21, 0
      // Predicated region
      $region33: #{basic_conv_forward.4} parent=31 // pred_check
        %p608 = pneg %p607
      $region34: #{basic_conv_forward.4} parent=31 // pred_check_branch
        %610 = sbr.rel (%p608) target = $region36
      $region35: #{basic_conv_forward.4} parent=31 // pred_region
        %vm611 = vcmask 8192
        %612 = vst.msk [vmem:[%s245] sm:$0x1] %vm611, 0.0
      $region36: #{basic_conv_forward.4} parent=31 // pred_fallthru
        _
      %v613 = vadd.f32 %v481, %v484
      %v614 = vadd.f32 %v613, %v489
      %v615 = vadd.f32 %v614, %v492
      %v616 = vadd.f32 %v615, %v497
      %v617 = vadd.f32 %v616, %v500
      %v618 = vadd.f32 %v617, %v505
      %v619 = vadd.f32 %v618, %v508
      %v620 = vadd.f32 %v619, %v513
      %v621 = vadd.f32 %v620, %v516
      %v622 = vadd.f32 %v621, %v521
      %v623 = vadd.f32 %v622, %v524
      %v624 = vadd.f32 %v623, %v529
      %v625 = vadd.f32 %v624, %v532
      %v626 = vadd.f32 %v625, %v537
      %v627 = vadd.f32 %v626, %v540
      %v628 = vadd.f32 %v627, %v545
      %v629 = vadd.f32 %v628, %v548
      %v630 = vadd.f32 %v629, %v553
      %v631 = vadd.f32 %v630, %v556
      %v632 = vadd.f32 %v631, %v561
      %v633 = vadd.f32 %v632, %v564
      %v634 = vadd.f32 %v633, %v569
      %v635 = vadd.f32 %v634, %v572
      %v636 = vadd.f32 %v635, %v577
      %v637 = vadd.f32 %v636, %v580
      %v638 = vadd.f32 %v637, %v585
      %v639 = vadd.f32 %v638, %v588
      %v640 = vadd.f32 %v639, %v593
      %v641 = vadd.f32 %v640, %v596
      %v642 = vadd.f32 %v641, %v601
      %v643 = vadd.f32 %v642, %v604
      %644 = vadd.xlane.f32.xlu0 %v643
      %v645 = vpop.xlane.xlu0 %644
      %v646 = vrot.slane %v645, 4
      %v647 = vadd.f32 %v645, %v646
      %v648 = vrot.slane %v647, 2
      %v649 = vadd.f32 %v647, %v648
      %v650 = vrot.slane %v649, 1
      %v651 = vadd.f32 %v649, %v650
      %s652 = vtos %v651
      %v653 = vstv %s652
      %v654 = vmul.f32 %v481, %v481
      %v655 = vmul.f32 %v484, %v484
      %v656 = vmul.f32 %v489, %v489
      %v657 = vmul.f32 %v492, %v492
      %v658 = vmul.f32 %v497, %v497
      %v659 = vmul.f32 %v500, %v500
      %v660 = vmul.f32 %v505, %v505
      %v661 = vmul.f32 %v508, %v508
      %v662 = vmul.f32 %v513, %v513
      %v663 = vmul.f32 %v516, %v516
      %v664 = vmul.f32 %v521, %v521
      %v665 = vmul.f32 %v524, %v524
      %v666 = vmul.f32 %v529, %v529
      %v667 = vmul.f32 %v532, %v532
      %v668 = vmul.f32 %v537, %v537
      %v669 = vmul.f32 %v540, %v540
      %v670 = vmul.f32 %v545, %v545
      %v671 = vmul.f32 %v548, %v548
      %v672 = vmul.f32 %v553, %v553
      %v673 = vmul.f32 %v556, %v556
      %v674 = vmul.f32 %v561, %v561
      %v675 = vmul.f32 %v564, %v564
      %v676 = vmul.f32 %v569, %v569
      %v677 = vmul.f32 %v572, %v572
      %v678 = vmul.f32 %v577, %v577
      %v679 = vmul.f32 %v580, %v580
      %v680 = vmul.f32 %v585, %v585
      %v681 = vmul.f32 %v588, %v588
      %v682 = vmul.f32 %v593, %v593
      %v683 = vmul.f32 %v596, %v596
      %v684 = vmul.f32 %v601, %v601
      %v685 = vmul.f32 %v604, %v604
      %v686 = vadd.f32 %v654, %v655
      %v687 = vadd.f32 %v686, %v656
      %v688 = vadd.f32 %v687, %v657
      %v689 = vadd.f32 %v688, %v658
      %v690 = vadd.f32 %v689, %v659
      %v691 = vadd.f32 %v690, %v660
      %v692 = vadd.f32 %v691, %v661
      %v693 = vadd.f32 %v692, %v662
      %v694 = vadd.f32 %v693, %v663
      %v695 = vadd.f32 %v694, %v664
      %v696 = vadd.f32 %v695, %v665
      %v697 = vadd.f32 %v696, %v666
      %v698 = vadd.f32 %v697, %v667
      %v699 = vadd.f32 %v698, %v668
      %v700 = vadd.f32 %v699, %v669
      %v701 = vadd.f32 %v700, %v670
      %v702 = vadd.f32 %v701, %v671
      %v703 = vadd.f32 %v702, %v672
      %v704 = vadd.f32 %v703, %v673
      %v705 = vadd.f32 %v704, %v674
      %v706 = vadd.f32 %v705, %v675
      %v707 = vadd.f32 %v706, %v676
      %v708 = vadd.f32 %v707, %v677
      %v709 = vadd.f32 %v708, %v678
      %v710 = vadd.f32 %v709, %v679
      %v711 = vadd.f32 %v710, %v680
      %v712 = vadd.f32 %v711, %v681
      %v713 = vadd.f32 %v712, %v682
      %v714 = vadd.f32 %v713, %v683
      %v715 = vadd.f32 %v714, %v684
      %v716 = vadd.f32 %v715, %v685
      %717 = vadd.xlane.f32.xlu0 %v716
      %v718 = vpop.xlane.xlu0 %717
      %v719 = vrot.slane %v718, 4
      %v720 = vadd.f32 %v718, %v719
      %v721 = vrot.slane %v720, 2
      %v722 = vadd.f32 %v720, %v721
      %v723 = vrot.slane %v722, 1
      %v724 = vadd.f32 %v722, %v723
      %s725 = vtos %v724
      %v726 = vstv %s725
      %v727 = vld [vmem:[%s245] sm:$0x1]
      %vm728 = vcmask 7168
      %v729 = vsel %vm728, %v653, %v726
      %v730 = vadd.f32 %v727, %v729
      %vm731 = vcmask 8192
      %732 = vst.msk [vmem:[%s245] sm:$0x1] %vm731, %v730
      %v733 = vpack.c.bf16 %v484, %v481
      %v734 = vpack.c.bf16 %v492, %v489
      %v735 = vpack.c.bf16 %v500, %v497
      %v736 = vpack.c.bf16 %v508, %v505
      %v737 = vpack.c.bf16 %v516, %v513
      %v738 = vpack.c.bf16 %v524, %v521
      %v739 = vpack.c.bf16 %v532, %v529
      %v740 = vpack.c.bf16 %v540, %v537
      %v741 = vpack.c.bf16 %v548, %v545
      %v742 = vpack.c.bf16 %v556, %v553
      %v743 = vpack.c.bf16 %v564, %v561
      %v744 = vpack.c.bf16 %v572, %v569
      %v745 = vpack.c.bf16 %v580, %v577
      %v746 = vpack.c.bf16 %v588, %v585
      %v747 = vpack.c.bf16 %v596, %v593
      %v748 = vpack.c.bf16 %v604, %v601
      %v765 = vunpack.c.l.b16 %v733
      %v766 = vunpack.c.h.b16 %v733
      %v767 = vunpack.c.l.b16 %v734
      %v768 = vunpack.c.h.b16 %v734
      %v769 = vunpack.c.l.b16 %v735
      %v770 = vunpack.c.h.b16 %v735
      %v771 = vunpack.c.l.b16 %v736
      %v772 = vunpack.c.h.b16 %v736
      %v773 = vunpack.c.l.b16 %v737
      %v774 = vunpack.c.h.b16 %v737
      %v775 = vunpack.c.l.b16 %v738
      %v776 = vunpack.c.h.b16 %v738
      %v777 = vunpack.c.l.b16 %v739
      %v778 = vunpack.c.h.b16 %v739
      %v779 = vunpack.c.l.b16 %v740
      %v780 = vunpack.c.h.b16 %v740
      %v781 = vunpack.c.l.b16 %v741
      %v782 = vunpack.c.h.b16 %v741
      %v783 = vunpack.c.l.b16 %v742
      %v784 = vunpack.c.h.b16 %v742
      %v785 = vunpack.c.l.b16 %v743
      %v786 = vunpack.c.h.b16 %v743
      %v787 = vunpack.c.l.b16 %v744
      %v788 = vunpack.c.h.b16 %v744
      %v789 = vunpack.c.l.b16 %v745
      %v790 = vunpack.c.h.b16 %v745
      %v791 = vunpack.c.l.b16 %v746
      %v792 = vunpack.c.h.b16 %v746
      %v793 = vunpack.c.l.b16 %v747
      %v794 = vunpack.c.h.b16 %v747
      %v795 = vunpack.c.l.b16 %v748
      %v796 = vunpack.c.h.b16 %v748
      %v797 = vpack.c.b16 %v765, %v765
      %v798 = vpack.c.b16 %v766, %v766
      %v799 = vpack.c.b16 %v767, %v767
      %v800 = vpack.c.b16 %v768, %v768
      %v801 = vpack.c.b16 %v769, %v769
      %v802 = vpack.c.b16 %v770, %v770
      %v803 = vpack.c.b16 %v771, %v771
      %v804 = vpack.c.b16 %v772, %v772
      %v805 = vpack.c.b16 %v773, %v773
      %v806 = vpack.c.b16 %v774, %v774
      %v807 = vpack.c.b16 %v775, %v775
      %v808 = vpack.c.b16 %v776, %v776
      %v809 = vpack.c.b16 %v777, %v777
      %v810 = vpack.c.b16 %v778, %v778
      %v811 = vpack.c.b16 %v779, %v779
      %v812 = vpack.c.b16 %v780, %v780
      %v813 = vpack.c.b16 %v781, %v781
      %v814 = vpack.c.b16 %v782, %v782
      %v815 = vpack.c.b16 %v783, %v783
      %v816 = vpack.c.b16 %v784, %v784
      %v817 = vpack.c.b16 %v785, %v785
      %v818 = vpack.c.b16 %v786, %v786
      %v819 = vpack.c.b16 %v787, %v787
      %v820 = vpack.c.b16 %v788, %v788
      %v821 = vpack.c.b16 %v789, %v789
      %v822 = vpack.c.b16 %v790, %v790
      %v823 = vpack.c.b16 %v791, %v791
      %v824 = vpack.c.b16 %v792, %v792
      %v825 = vpack.c.b16 %v793, %v793
      %v826 = vpack.c.b16 %v794, %v794
      %v827 = vpack.c.b16 %v795, %v795
      %v828 = vpack.c.b16 %v796, %v796
      %861 = vst [vmem:[%s241] sm:$0xf] %v797
      %862 = vst [vmem:[%s241 + $0x4] sm:$0xf] %v798
      %863 = vst [vmem:[%s241 + $0x8] sm:$0xf] %v799
      %864 = vst [vmem:[%s241 + $0xc] sm:$0xf] %v800
      %865 = vst [vmem:[%s241 + $0x10] sm:$0xf] %v801
      %866 = vst [vmem:[%s241 + $0x14] sm:$0xf] %v802
      %867 = vst [vmem:[%s241 + $0x18] sm:$0xf] %v803
      %868 = vst [vmem:[%s241 + $0x1c] sm:$0xf] %v804
      %869 = vst [vmem:[%s241 + $0x20] sm:$0xf] %v805
      %870 = vst [vmem:[%s241 + $0x24] sm:$0xf] %v806
      %871 = vst [vmem:[%s241 + $0x28] sm:$0xf] %v807
      %872 = vst [vmem:[%s241 + $0x2c] sm:$0xf] %v808
      %873 = vst [vmem:[%s241 + $0x30] sm:$0xf] %v809
      %874 = vst [vmem:[%s241 + $0x34] sm:$0xf] %v810
      %875 = vst [vmem:[%s241 + $0x38] sm:$0xf] %v811
      %876 = vst [vmem:[%s241 + $0x3c] sm:$0xf] %v812
      %877 = vst [vmem:[%s241 + $0x40] sm:$0xf] %v813
      %878 = vst [vmem:[%s241 + $0x44] sm:$0xf] %v814
      %879 = vst [vmem:[%s241 + $0x48] sm:$0xf] %v815
      %880 = vst [vmem:[%s241 + $0x4c] sm:$0xf] %v816
      %881 = vst [vmem:[%s241 + $0x50] sm:$0xf] %v817
      %882 = vst [vmem:[%s241 + $0x54] sm:$0xf] %v818
      %883 = vst [vmem:[%s241 + $0x58] sm:$0xf] %v819
      %884 = vst [vmem:[%s241 + $0x5c] sm:$0xf] %v820
      %885 = vst [vmem:[%s241 + $0x60] sm:$0xf] %v821
      %886 = vst [vmem:[%s241 + $0x64] sm:$0xf] %v822
      %887 = vst [vmem:[%s241 + $0x68] sm:$0xf] %v823
      %888 = vst [vmem:[%s241 + $0x6c] sm:$0xf] %v824
      %889 = vst [vmem:[%s241 + $0x70] sm:$0xf] %v825
      %890 = vst [vmem:[%s241 + $0x74] sm:$0xf] %v826
      %891 = vst [vmem:[%s241 + $0x78] sm:$0xf] %v827
      %892 = vst [vmem:[%s241 + $0x7c] sm:$0xf] %v828
      %s893 = smul.u32 32, %s21
      %p894 = scmp.lt.s32.totalorder %s20, 1
      %s895 = scalar_select %p894, %s20, 1
      %p896 = scmp.lt.s32.totalorder %s893, 31
      %s897 = scalar_select %p896, %s893, 31
      %s898 = smul.addr %s895, 32
      %s899 = sadd.s32 %s897, %s898
      %s900 = smul.addr %s899, 4
      %s901 = scalar_lea.vmem %s3, %s900
      %p902 = scmp.lt.s32.totalorder %s20, 1
      %s903 = scalar_select %p902, %s20, 1
      %s904 = scalar_lea.vmem %s4, %s903
      // Predicated region
      $region37: #{basic_conv_forward.4} parent=31 // pred_check
        %p905 = pneg %p118
      $region38: #{basic_conv_forward.4} parent=31 // pred_check_branch
        %907 = sbr.rel (%p905) target = $region40
      $region39: #{basic_conv_forward.4} parent=31 // pred_region
        %s908 = smul.u32 32, %s21
      $region40: #{basic_conv_forward.4} parent=31 // pred_fallthru
        _
      // Predicated region
      $region41: #{basic_conv_forward.4} parent=31 // pred_check
        %p909 = pneg %p144
      $region42: #{basic_conv_forward.4} parent=31 // pred_check_branch
        %911 = sbr.rel (%p909) target = $region44
      $region43: #{basic_conv_forward.4} parent=31 // pred_region
        _
      $region44: #{basic_conv_forward.4} parent=31 // pred_fallthru
        _
    $region32: #{basic_conv_forward.4} parent=5 // pred_fallthru
      _
    %p912 = scmp.le.s32.totalorder 2, %s11
    // Predicated region
    $region45: #{basic_conv_forward.4} parent=5 // pred_check
      %p913 = pneg %p912
    $region46: #{basic_conv_forward.4} parent=5 // pred_check_branch
      %915 = sbr.rel (%p913) target = $region48
    $region47: #{basic_conv_forward.4} parent=5 // pred_region
      %s916 = ssub.s32 %s11, 2
      // Predicated region
      $region49: #{basic_conv_forward.4} parent=47 // pred_check
        %p917 = pneg %p124
      $region50: #{basic_conv_forward.4} parent=47 // pred_check_branch
        %919 = sbr.rel (%p917) target = $region52
      $region51: #{basic_conv_forward.4} parent=47 // pred_region
        %s920 = smul.u32 32, %s23
        %p921 = scmp.lt.s32.totalorder %s22, 1
        %s922 = scalar_select %p921, %s22, 1
        %p923 = scmp.lt.s32.totalorder %s920, 31
        %s924 = scalar_select %p923, %s920, 31
        %s925 = smul.addr %s922, 32
        %s926 = sadd.s32 %s924, %s925
        %s927 = smul.addr %s926, 4
        %s928 = scalar_lea.vmem %s3, %s927
      $region52: #{basic_conv_forward.4} parent=47 // pred_fallthru
        _
      // Predicated region
      $region53: #{basic_conv_forward.4} parent=47 // pred_check
        %p929 = pneg %p150
      $region54: #{basic_conv_forward.4} parent=47 // pred_check_branch
        %931 = sbr.rel (%p929) target = $region56
      $region55: #{basic_conv_forward.4} parent=47 // pred_region
        %p932 = scmp.lt.s32.totalorder %s22, 1
        %s933 = scalar_select %p932, %s22, 1
        %s934 = scalar_lea.vmem %s4, %s933
      $region56: #{basic_conv_forward.4} parent=47 // pred_fallthru
        _
    $region48: #{basic_conv_forward.4} parent=5 // pred_fallthru
      _
  $region6: #{basic_conv_forward.4} parent=0 // loop_footer
    %s15 = sadd.s32 1, %s11
  $region7: #{basic_conv_forward.4} parent=0 // loop_footer_branch
    %10 = sbr.rel target = $region3
  $region8: #{basic_conv_forward.4} parent=0 // loop_exit
    _

// kernel: basic_conv_forward.7
$region0: #{basic_conv_forward.7}
  #allocation0 [shape = 'u32[]', space=smem, size = 0x4, offset = 0x4, fixed_abs, tag = 'smem constant byte address 0x4 - core index']
  #allocation1 [shape = 'u32[144,128]{1,0:T(1,128)}', space=vmem, size = 0x12000, scoped, tag = 'internal scratch']
  %s0 = inlined_call_operand.vmem [shape: bf16[2,256,128], index: 0, kind: input, shape index: {}]
  %s1 = inlined_call_operand.vmem [shape: f32[2,1,128], index: 1, kind: input, shape index: {}]
  %s2 = inlined_call_operand.vmem [shape: f32[2,1,128], index: 2, kind: input, shape index: {}]
  %s3 = inlined_call_operand.vmem [shape: f32[2,256,128], index: 3, kind: output, shape index: {}]
  %s4 = sld [smem:[#allocation0]]
  $region45: #{basic_conv_forward.7} parent=0
    _
  %s6 = ssub.s32 1, %s4
  %s7 = scalar_select 0, %s6, %s4
  loop: start=0, step=1, limit=4
  $region2: #{basic_conv_forward.7} parent=0 // loop_pre_header
    _
  $region3: #{basic_conv_forward.7} parent=0 // loop_header
    %s9 = sphi 0, %s13
    %p10 = scmp.ge.s32.totalorder %s9, 4
    %s16 = sphi 0, %s28
    %s17 = sphi 0, %s24
    %s18 = sphi 0, %s16
    %s19 = sphi 0, %s17
    %s20 = sphi 0, %s18
    %s21 = sphi 0, %s19
    %s33 = sphi 0, %s35
    %s36 = sphi 0, %s33
    %s37 = sphi 0, %s36
    %s53 = sphi 0, %s37
    %s59 = sphi 0, %s61
    %s62 = sphi 0, %s59
    %s63 = sphi 0, %s62
    %s79 = sphi 0, %s63
    %s85 = sphi 0, %s87
    %s88 = sphi 0, %s85
    %s89 = sphi 0, %s88
    %s105 = sphi 0, %s89
    %s113 = sphi 0, %s115
    %s116 = sphi 0, %s113
    %s117 = sphi 0, %s116
    %s133 = sphi 0, %s117
  $region4: #{basic_conv_forward.7} parent=0 // loop_header_branch
    %12 = sbr.rel (%p10) target = $region8
  $region5: #{basic_conv_forward.7} parent=0 // loop_body
    %s14 = ssub.s32 %s9, 1
    %s15 = ssub.s32 %s9, 2
    %s22 = sadd.s32 1, %s17
    %p23 = scmp.ge.s32.totalorder %s22, 1
    %s24 = scalar_select %p23, 0, %s22
    %s25 = sadd.s32 1, %s16
    %s26 = scalar_select %p23, %s25, %s16
    %p27 = scmp.ge.s32.totalorder %s26, 2
    %s28 = scalar_select %p27, 0, %s26
    %s29 = ssub.s32 %s16, %s28
    %s30 = ssub.s32 %s17, %s24
    %s31 = sor.u32 %s29, %s30
    %p32 = scmp.eq.s32.totalorder %s31, 0
    %s34 = sadd.s32 %s33, 1
    %s35 = scalar_select %p32, %s33, %s34
    %p38 = pneg %p32
    %p39 = scmp.eq.s32.totalorder %s9, 1
    %p40 = por %p38, %p39
    %p41 = scmp.ne.s32.totalorder %s33, %s36
    %p42 = scmp.eq.s32.totalorder %s9, 0
    %p43 = por %p41, %p42
    %p44 = scmp.ne.s32.totalorder %s33, %s36
    %p45 = scmp.eq.s32.totalorder %s14, 1
    %p46 = por %p44, %p45
    %p47 = scmp.ne.s32.totalorder %s36, %s37
    %p48 = scmp.eq.s32.totalorder %s14, 0
    %p49 = por %p47, %p48
    %p50 = scmp.ne.s32.totalorder %s36, %s37
    %p51 = scmp.eq.s32.totalorder %s15, 1
    %p52 = por %p50, %p51
    %p54 = scmp.ne.s32.totalorder %s37, %s53
    %p55 = scmp.eq.s32.totalorder %s15, 0
    %p56 = por %p54, %p55
    %s57 = ssub.s32 %s16, %s28
    %p58 = scmp.eq.s32.totalorder %s57, 0
    %s60 = sadd.s32 %s59, 1
    %s61 = scalar_select %p58, %s59, %s60
    %p64 = pneg %p58
    %p65 = scmp.eq.s32.totalorder %s9, 1
    %p66 = por %p64, %p65
    %p67 = scmp.ne.s32.totalorder %s59, %s62
    %p68 = scmp.eq.s32.totalorder %s9, 0
    %p69 = por %p67, %p68
    %p70 = scmp.ne.s32.totalorder %s59, %s62
    %p71 = scmp.eq.s32.totalorder %s14, 1
    %p72 = por %p70, %p71
    %p73 = scmp.ne.s32.totalorder %s62, %s63
    %p74 = scmp.eq.s32.totalorder %s14, 0
    %p75 = por %p73, %p74
    %p76 = scmp.ne.s32.totalorder %s62, %s63
    %p77 = scmp.eq.s32.totalorder %s15, 1
    %p78 = por %p76, %p77
    %p80 = scmp.ne.s32.totalorder %s63, %s79
    %p81 = scmp.eq.s32.totalorder %s15, 0
    %p82 = por %p80, %p81
    %s83 = ssub.s32 %s16, %s28
    %p84 = scmp.eq.s32.totalorder %s83, 0
    %s86 = sadd.s32 %s85, 1
    %s87 = scalar_select %p84, %s85, %s86
    %p90 = pneg %p84
    %p91 = scmp.eq.s32.totalorder %s9, 1
    %p92 = por %p90, %p91
    %p93 = scmp.ne.s32.totalorder %s85, %s88
    %p94 = scmp.eq.s32.totalorder %s9, 0
    %p95 = por %p93, %p94
    %p96 = scmp.ne.s32.totalorder %s85, %s88
    %p97 = scmp.eq.s32.totalorder %s14, 1
    %p98 = por %p96, %p97
    %p99 = scmp.ne.s32.totalorder %s88, %s89
    %p100 = scmp.eq.s32.totalorder %s14, 0
    %p101 = por %p99, %p100
    %p102 = scmp.ne.s32.totalorder %s88, %s89
    %p103 = scmp.eq.s32.totalorder %s15, 1
    %p104 = por %p102, %p103
    %p106 = scmp.ne.s32.totalorder %s89, %s105
    %p107 = scmp.eq.s32.totalorder %s15, 0
    %p108 = por %p106, %p107
    %s109 = ssub.s32 %s16, %s28
    %s110 = ssub.s32 %s17, %s24
    %s111 = sor.u32 %s109, %s110
    %p112 = scmp.eq.s32.totalorder %s111, 0
    %s114 = sadd.s32 %s113, 1
    %s115 = scalar_select %p112, %s113, %s114
    %p118 = pneg %p112
    %p119 = scmp.eq.s32.totalorder %s9, 1
    %p120 = por %p118, %p119
    %p121 = scmp.ne.s32.totalorder %s113, %s116
    %p122 = scmp.eq.s32.totalorder %s9, 0
    %p123 = por %p121, %p122
    %p124 = scmp.ne.s32.totalorder %s113, %s116
    %p125 = scmp.eq.s32.totalorder %s14, 1
    %p126 = por %p124, %p125
    %p127 = scmp.ne.s32.totalorder %s116, %s117
    %p128 = scmp.eq.s32.totalorder %s14, 0
    %p129 = por %p127, %p128
    %p130 = scmp.ne.s32.totalorder %s116, %s117
    %p131 = scmp.eq.s32.totalorder %s15, 1
    %p132 = por %p130, %p131
    %p134 = scmp.ne.s32.totalorder %s117, %s133
    %p135 = scmp.eq.s32.totalorder %s15, 0
    %p136 = por %p134, %p135
    %p137 = scmp.le.s32.totalorder 1, %s9
    %p138 = scmp.lt.s32.totalorder %s9, 3
    %p139 = pnand %p137, %p138
    %p140 = pneg %p139
    // Predicated region
    $region9: #{basic_conv_forward.7} parent=5 // pred_check
      _
    $region10: #{basic_conv_forward.7} parent=5 // pred_check_branch
      %142 = sbr.rel (%p139) target = $region12
    $region11: #{basic_conv_forward.7} parent=5 // pred_region
      %s143 = ssub.s32 %s9, 1
    $region12: #{basic_conv_forward.7} parent=5 // pred_fallthru
      _
    %p144 = scmp.lt.s32.totalorder %s9, 2
    // Predicated region
    $region13: #{basic_conv_forward.7} parent=5 // pred_check
      %p145 = pneg %p144
    $region14: #{basic_conv_forward.7} parent=5 // pred_check_branch
      %147 = sbr.rel (%p145) target = $region16
    $region15: #{basic_conv_forward.7} parent=5 // pred_region
      // Predicated region
      $region17: #{basic_conv_forward.7} parent=15 // pred_check
        %p148 = pneg %p43
      $region18: #{basic_conv_forward.7} parent=15 // pred_check_branch
        %150 = sbr.rel (%p148) target = $region20
      $region19: #{basic_conv_forward.7} parent=15 // pred_region
        %s151 = smul.u32 32, %s17
        %p152 = scmp.lt.s32.totalorder %s16, 1
        %s153 = scalar_select %p152, %s16, 1
        %p154 = scmp.lt.s32.totalorder %s151, 31
        %s155 = scalar_select %p154, %s151, 31
        %s156 = smul.addr %s153, 32
        %s157 = sadd.s32 %s155, %s156
        %s158 = smul.addr %s157, 4
        %s159 = scalar_lea.vmem %s0, %s158
        %s160 = smul.u32 32, %s17
      $region20: #{basic_conv_forward.7} parent=15 // pred_fallthru
        _
      // Predicated region
      $region21: #{basic_conv_forward.7} parent=15 // pred_check
        %p161 = pneg %p69
      $region22: #{basic_conv_forward.7} parent=15 // pred_check_branch
        %163 = sbr.rel (%p161) target = $region24
      $region23: #{basic_conv_forward.7} parent=15 // pred_region
        %p164 = scmp.lt.s32.totalorder %s16, 1
        %s165 = scalar_select %p164, %s16, 1
        %s166 = scalar_lea.vmem %s1, %s165
      $region24: #{basic_conv_forward.7} parent=15 // pred_fallthru
        _
      // Predicated region
      $region25: #{basic_conv_forward.7} parent=15 // pred_check
        %p167 = pneg %p95
      $region26: #{basic_conv_forward.7} parent=15 // pred_check_branch
        %169 = sbr.rel (%p167) target = $region28
      $region27: #{basic_conv_forward.7} parent=15 // pred_region
        %p170 = scmp.lt.s32.totalorder %s16, 1
        %s171 = scalar_select %p170, %s16, 1
        %s172 = scalar_lea.vmem %s2, %s171
      $region28: #{basic_conv_forward.7} parent=15 // pred_fallthru
        _
    $region16: #{basic_conv_forward.7} parent=5 // pred_fallthru
      _
    %p173 = scmp.le.s32.totalorder 1, %s9
    %p174 = scmp.lt.s32.totalorder %s9, 3
    %p175 = pnand %p173, %p174
    %p176 = pneg %p175
    // Predicated region
    $region29: #{basic_conv_forward.7} parent=5 // pred_check
      _
    $region30: #{basic_conv_forward.7} parent=5 // pred_check_branch
      %178 = sbr.rel (%p175) target = $region32
    $region31: #{basic_conv_forward.7} parent=5 // pred_region
      %s179 = ssub.s32 %s9, 1
      %s180 = smul.u32 32, %s19
      %p181 = scmp.lt.s32.totalorder %s18, 1
      %s182 = scalar_select %p181, %s18, 1
      %p183 = scmp.lt.s32.totalorder %s180, 31
      %s184 = scalar_select %p183, %s180, 31
      %s185 = smul.addr %s182, 32
      %s186 = sadd.s32 %s184, %s185
      %s187 = smul.addr %s186, 4
      %s188 = scalar_lea.vmem %s0, %s187
      %p189 = pneg %p49
      %p190 = pneg %p46
      %p191 = scmp.lt.s32.totalorder %s18, 1
      %s192 = scalar_select %p191, %s18, 1
      %s193 = scalar_lea.vmem %s1, %s192
      %p194 = pneg %p75
      %p195 = pneg %p72
      %p196 = scmp.lt.s32.totalorder %s18, 1
      %s197 = scalar_select %p196, %s18, 1
      %s198 = scalar_lea.vmem %s2, %s197
      %p199 = pneg %p101
      %p200 = pneg %p98
      %p201 = pneg %p129
      %p202 = pneg %p126
      %s203 = smul.u32 32, %s19
      %p204 = scmp.lt.s32.totalorder %s18, 1
      %s205 = scalar_select %p204, %s18, 1
      %p206 = scmp.lt.s32.totalorder %s203, 31
      %s207 = scalar_select %p206, %s203, 31
      %s208 = smul.addr %s205, 32
      %s209 = sadd.s32 %s207, %s208
      %s210 = smul.addr %s209, 8
      %s211 = scalar_lea.vmem %s3, %s210
      %s212 = smul.u32 32, %s19
      %p213 = scmp.lt.s32.totalorder %s18, 1
      %s214 = scalar_select %p213, %s18, 1
      %p215 = scmp.lt.s32.totalorder %s212, 31
      %s216 = scalar_select %p215, %s212, 31
      %s217 = smul.addr %s214, 32
      %s218 = sadd.s32 %s216, %s217
      %s219 = smul.addr %s218, 4
      %s220 = scalar_lea.vmem %s0, %s219
      %s221 = smul.u32 32, %s19
      %p222 = scmp.lt.s32.totalorder %s18, 1
      %s223 = scalar_select %p222, %s18, 1
      %s224 = scalar_lea.vmem %s1, %s223
      %p225 = scmp.lt.s32.totalorder %s18, 1
      %s226 = scalar_select %p225, %s18, 1
      %s227 = scalar_lea.vmem %s2, %s226
      %s228 = smul.u32 32, %s19
      %p229 = scmp.lt.s32.totalorder %s18, 1
      %s230 = scalar_select %p229, %s18, 1
      %p231 = scmp.lt.s32.totalorder %s228, 31
      %s232 = scalar_select %p231, %s228, 31
      %s233 = smul.addr %s230, 32
      %s234 = sadd.s32 %s232, %s233
      %s235 = smul.addr %s234, 8
      %s236 = scalar_lea.vmem %s3, %s235
      %s237 = smul.u32 32, %s19
      %v238 = vld [vmem:[%s220] sm:$0xf]
      %v239 = vld [vmem:[%s220 + $0x4] sm:$0xf]
      %v240 = vld [vmem:[%s220 + $0x8] sm:$0xf]
      %v241 = vld [vmem:[%s220 + $0xc] sm:$0xf]
      %v242 = vld [vmem:[%s220 + $0x10] sm:$0xf]
      %v243 = vld [vmem:[%s220 + $0x14] sm:$0xf]
      %v244 = vld [vmem:[%s220 + $0x18] sm:$0xf]
      %v245 = vld [vmem:[%s220 + $0x1c] sm:$0xf]
      %v246 = vld [vmem:[%s220 + $0x20] sm:$0xf]
      %v247 = vld [vmem:[%s220 + $0x24] sm:$0xf]
      %v248 = vld [vmem:[%s220 + $0x28] sm:$0xf]
      %v249 = vld [vmem:[%s220 + $0x2c] sm:$0xf]
      %v250 = vld [vmem:[%s220 + $0x30] sm:$0xf]
      %v251 = vld [vmem:[%s220 + $0x34] sm:$0xf]
      %v252 = vld [vmem:[%s220 + $0x38] sm:$0xf]
      %v253 = vld [vmem:[%s220 + $0x3c] sm:$0xf]
      %v254 = vld [vmem:[%s220 + $0x40] sm:$0xf]
      %v255 = vld [vmem:[%s220 + $0x44] sm:$0xf]
      %v256 = vld [vmem:[%s220 + $0x48] sm:$0xf]
      %v257 = vld [vmem:[%s220 + $0x4c] sm:$0xf]
      %v258 = vld [vmem:[%s220 + $0x50] sm:$0xf]
      %v259 = vld [vmem:[%s220 + $0x54] sm:$0xf]
      %v260 = vld [vmem:[%s220 + $0x58] sm:$0xf]
      %v261 = vld [vmem:[%s220 + $0x5c] sm:$0xf]
      %v262 = vld [vmem:[%s220 + $0x60] sm:$0xf]
      %v263 = vld [vmem:[%s220 + $0x64] sm:$0xf]
      %v264 = vld [vmem:[%s220 + $0x68] sm:$0xf]
      %v265 = vld [vmem:[%s220 + $0x6c] sm:$0xf]
      %v266 = vld [vmem:[%s220 + $0x70] sm:$0xf]
      %v267 = vld [vmem:[%s220 + $0x74] sm:$0xf]
      %v268 = vld [vmem:[%s220 + $0x78] sm:$0xf]
      %v269 = vld [vmem:[%s220 + $0x7c] sm:$0xf]
      %v270 = vunpack.c.l.bf16 %v238
      %v271 = vunpack.c.l.bf16 %v239
      %v272 = vunpack.c.l.bf16 %v240
      %v273 = vunpack.c.l.bf16 %v241
      %v274 = vunpack.c.l.bf16 %v242
      %v275 = vunpack.c.l.bf16 %v243
      %v276 = vunpack.c.l.bf16 %v244
      %v277 = vunpack.c.l.bf16 %v245
      %v278 = vunpack.c.l.bf16 %v246
      %v279 = vunpack.c.l.bf16 %v247
      %v280 = vunpack.c.l.bf16 %v248
      %v281 = vunpack.c.l.bf16 %v249
      %v282 = vunpack.c.l.bf16 %v250
      %v283 = vunpack.c.l.bf16 %v251
      %v284 = vunpack.c.l.bf16 %v252
      %v285 = vunpack.c.l.bf16 %v253
      %v286 = vunpack.c.l.bf16 %v254
      %v287 = vunpack.c.l.bf16 %v255
      %v288 = vunpack.c.l.bf16 %v256
      %v289 = vunpack.c.l.bf16 %v257
      %v290 = vunpack.c.l.bf16 %v258
      %v291 = vunpack.c.l.bf16 %v259
      %v292 = vunpack.c.l.bf16 %v260
      %v293 = vunpack.c.l.bf16 %v261
      %v294 = vunpack.c.l.bf16 %v262
      %v295 = vunpack.c.l.bf16 %v263
      %v296 = vunpack.c.l.bf16 %v264
      %v297 = vunpack.c.l.bf16 %v265
      %v298 = vunpack.c.l.bf16 %v266
      %v299 = vunpack.c.l.bf16 %v267
      %v300 = vunpack.c.l.bf16 %v268
      %v301 = vunpack.c.l.bf16 %v269
      %v302 = vld [vmem:[%s224] sm:$0x1]
      %v304 = vlaneseq
      %v305 = vshrl.u32 %v304, 7
      %v306 = vsub.s32 0, %v305
      %v307 = vrot.slane %v302, %v306
      %v309 = vmul.f32 %v270, %v307
      %v310 = vmul.f32 %v271, %v307
      %v311 = vmul.f32 %v272, %v307
      %v312 = vmul.f32 %v273, %v307
      %v313 = vmul.f32 %v274, %v307
      %v314 = vmul.f32 %v275, %v307
      %v315 = vmul.f32 %v276, %v307
      %v316 = vmul.f32 %v277, %v307
      %v317 = vmul.f32 %v278, %v307
      %v318 = vmul.f32 %v279, %v307
      %v319 = vmul.f32 %v280, %v307
      %v320 = vmul.f32 %v281, %v307
      %v321 = vmul.f32 %v282, %v307
      %v322 = vmul.f32 %v283, %v307
      %v323 = vmul.f32 %v284, %v307
      %v324 = vmul.f32 %v285, %v307
      %v325 = vmul.f32 %v286, %v307
      %v326 = vmul.f32 %v287, %v307
      %v327 = vmul.f32 %v288, %v307
      %v328 = vmul.f32 %v289, %v307
      %v329 = vmul.f32 %v290, %v307
      %v330 = vmul.f32 %v291, %v307
      %v331 = vmul.f32 %v292, %v307
      %v332 = vmul.f32 %v293, %v307
      %v333 = vmul.f32 %v294, %v307
      %v334 = vmul.f32 %v295, %v307
      %v335 = vmul.f32 %v296, %v307
      %v336 = vmul.f32 %v297, %v307
      %v337 = vmul.f32 %v298, %v307
      %v338 = vmul.f32 %v299, %v307
      %v339 = vmul.f32 %v300, %v307
      %v340 = vmul.f32 %v301, %v307
      %v341 = vld [vmem:[%s227] sm:$0x1]
      %v343 = vlaneseq
      %v344 = vshrl.u32 %v343, 7
      %v345 = vsub.s32 0, %v344
      %v346 = vrot.slane %v341, %v345
      %v348 = vadd.f32 %v309, %v346
      %v349 = vadd.f32 %v310, %v346
      %v350 = vadd.f32 %v311, %v346
      %v351 = vadd.f32 %v312, %v346
      %v352 = vadd.f32 %v313, %v346
      %v353 = vadd.f32 %v314, %v346
      %v354 = vadd.f32 %v315, %v346
      %v355 = vadd.f32 %v316, %v346
      %v356 = vadd.f32 %v317, %v346
      %v357 = vadd.f32 %v318, %v346
      %v358 = vadd.f32 %v319, %v346
      %v359 = vadd.f32 %v320, %v346
      %v360 = vadd.f32 %v321, %v346
      %v361 = vadd.f32 %v322, %v346
      %v362 = vadd.f32 %v323, %v346
      %v363 = vadd.f32 %v324, %v346
      %v364 = vadd.f32 %v325, %v346
      %v365 = vadd.f32 %v326, %v346
      %v366 = vadd.f32 %v327, %v346
      %v367 = vadd.f32 %v328, %v346
      %v368 = vadd.f32 %v329, %v346
      %v369 = vadd.f32 %v330, %v346
      %v370 = vadd.f32 %v331, %v346
      %v371 = vadd.f32 %v332, %v346
      %v372 = vadd.f32 %v333, %v346
      %v373 = vadd.f32 %v334, %v346
      %v374 = vadd.f32 %v335, %v346
      %v375 = vadd.f32 %v336, %v346
      %v376 = vadd.f32 %v337, %v346
      %v377 = vadd.f32 %v338, %v346
      %v378 = vadd.f32 %v339, %v346
      %v379 = vadd.f32 %v340, %v346
      %v380 = vxor.u32 %v348, 2147483648
      %v381 = vxor.u32 %v349, 2147483648
      %v382 = vxor.u32 %v350, 2147483648
      %v383 = vxor.u32 %v351, 2147483648
      %v384 = vxor.u32 %v352, 2147483648
      %v385 = vxor.u32 %v353, 2147483648
      %v386 = vxor.u32 %v354, 2147483648
      %v387 = vxor.u32 %v355, 2147483648
      %v388 = vxor.u32 %v356, 2147483648
      %v389 = vxor.u32 %v357, 2147483648
      %v390 = vxor.u32 %v358, 2147483648
      %v391 = vxor.u32 %v359, 2147483648
      %v392 = vxor.u32 %v360, 2147483648
      %v393 = vxor.u32 %v361, 2147483648
      %v394 = vxor.u32 %v362, 2147483648
      %v395 = vxor.u32 %v363, 2147483648
      %v396 = vxor.u32 %v364, 2147483648
      %v397 = vxor.u32 %v365, 2147483648
      %v398 = vxor.u32 %v366, 2147483648
      %v399 = vxor.u32 %v367, 2147483648
      %v400 = vxor.u32 %v368, 2147483648
      %v401 = vxor.u32 %v369, 2147483648
      %v402 = vxor.u32 %v370, 2147483648
      %v403 = vxor.u32 %v371, 2147483648
      %v404 = vxor.u32 %v372, 2147483648
      %v405 = vxor.u32 %v373, 2147483648
      %v406 = vxor.u32 %v374, 2147483648
      %v407 = vxor.u32 %v375, 2147483648
      %v408 = vxor.u32 %v376, 2147483648
      %v409 = vxor.u32 %v377, 2147483648
      %v410 = vxor.u32 %v378, 2147483648
      %v411 = vxor.u32 %v379, 2147483648
      %v412 = vmul.f32 %v380, 1.442695
      %v413 = vpow.pop %v412
      %v414 = vmul.f32 %v381, 1.442695
      %v415 = vpow.pop %v414
      %v416 = vmul.f32 %v382, 1.442695
      %v417 = vpow.pop %v416
      %v418 = vmul.f32 %v383, 1.442695
      %v419 = vpow.pop %v418
      %v420 = vmul.f32 %v384, 1.442695
      %v421 = vpow.pop %v420
      %v422 = vmul.f32 %v385, 1.442695
      %v423 = vpow.pop %v422
      %v424 = vmul.f32 %v386, 1.442695
      %v425 = vpow.pop %v424
      %v426 = vmul.f32 %v387, 1.442695
      %v427 = vpow.pop %v426
      %v428 = vmul.f32 %v388, 1.442695
      %v429 = vpow.pop %v428
      %v430 = vmul.f32 %v389, 1.442695
      %v431 = vpow.pop %v430
      %v432 = vmul.f32 %v390, 1.442695
      %v433 = vpow.pop %v432
      %v434 = vmul.f32 %v391, 1.442695
      %v435 = vpow.pop %v434
      %v436 = vmul.f32 %v392, 1.442695
      %v437 = vpow.pop %v436
      %v438 = vmul.f32 %v393, 1.442695
      %v439 = vpow.pop %v438
      %v440 = vmul.f32 %v394, 1.442695
      %v441 = vpow.pop %v440
      %v442 = vmul.f32 %v395, 1.442695
      %v443 = vpow.pop %v442
      %v444 = vmul.f32 %v396, 1.442695
      %v445 = vpow.pop %v444
      %v446 = vmul.f32 %v397, 1.442695
      %v447 = vpow.pop %v446
      %v448 = vmul.f32 %v398, 1.442695
      %v449 = vpow.pop %v448
      %v450 = vmul.f32 %v399, 1.442695
      %v451 = vpow.pop %v450
      %v452 = vmul.f32 %v400, 1.442695
      %v453 = vpow.pop %v452
      %v454 = vmul.f32 %v401, 1.442695
      %v455 = vpow.pop %v454
      %v456 = vmul.f32 %v402, 1.442695
      %v457 = vpow.pop %v456
      %v458 = vmul.f32 %v403, 1.442695
      %v459 = vpow.pop %v458
      %v460 = vmul.f32 %v404, 1.442695
      %v461 = vpow.pop %v460
      %v462 = vmul.f32 %v405, 1.442695
      %v463 = vpow.pop %v462
      %v464 = vmul.f32 %v406, 1.442695
      %v465 = vpow.pop %v464
      %v466 = vmul.f32 %v407, 1.442695
      %v467 = vpow.pop %v466
      %v468 = vmul.f32 %v408, 1.442695
      %v469 = vpow.pop %v468
      %v470 = vmul.f32 %v409, 1.442695
      %v471 = vpow.pop %v470
      %v472 = vmul.f32 %v410, 1.442695
      %v473 = vpow.pop %v472
      %v474 = vmul.f32 %v411, 1.442695
      %v475 = vpow.pop %v474
      %v476 = vadd.f32 %v413, 1.0
      %v477 = vadd.f32 %v415, 1.0
      %v478 = vadd.f32 %v417, 1.0
      %v479 = vadd.f32 %v419, 1.0
      %v480 = vadd.f32 %v421, 1.0
      %v481 = vadd.f32 %v423, 1.0
      %v482 = vadd.f32 %v425, 1.0
      %v483 = vadd.f32 %v427, 1.0
      %v484 = vadd.f32 %v429, 1.0
      %v485 = vadd.f32 %v431, 1.0
      %v486 = vadd.f32 %v433, 1.0
      %v487 = vadd.f32 %v435, 1.0
      %v488 = vadd.f32 %v437, 1.0
      %v489 = vadd.f32 %v439, 1.0
      %v490 = vadd.f32 %v441, 1.0
      %v491 = vadd.f32 %v443, 1.0
      %v492 = vadd.f32 %v445, 1.0
      %v493 = vadd.f32 %v447, 1.0
      %v494 = vadd.f32 %v449, 1.0
      %v495 = vadd.f32 %v451, 1.0
      %v496 = vadd.f32 %v453, 1.0
      %v497 = vadd.f32 %v455, 1.0
      %v498 = vadd.f32 %v457, 1.0
      %v499 = vadd.f32 %v459, 1.0
      %v500 = vadd.f32 %v461, 1.0
      %v501 = vadd.f32 %v463, 1.0
      %v502 = vadd.f32 %v465, 1.0
      %v503 = vadd.f32 %v467, 1.0
      %v504 = vadd.f32 %v469, 1.0
      %v505 = vadd.f32 %v471, 1.0
      %v506 = vadd.f32 %v473, 1.0
      %v507 = vadd.f32 %v475, 1.0
      %v508 = vrcp.pop %v476
      %v509 = vmul.f32 1.0, %v508
      %v510 = vrcp.pop %v477
      %v511 = vmul.f32 1.0, %v510
      %v512 = vrcp.pop %v478
      %v513 = vmul.f32 1.0, %v512
      %v514 = vrcp.pop %v479
      %v515 = vmul.f32 1.0, %v514
      %v516 = vrcp.pop %v480
      %v517 = vmul.f32 1.0, %v516
      %v518 = vrcp.pop %v481
      %v519 = vmul.f32 1.0, %v518
      %v520 = vrcp.pop %v482
      %v521 = vmul.f32 1.0, %v520
      %v522 = vrcp.pop %v483
      %v523 = vmul.f32 1.0, %v522
      %v524 = vrcp.pop %v484
      %v525 = vmul.f32 1.0, %v524
      %v526 = vrcp.pop %v485
      %v527 = vmul.f32 1.0, %v526
      %v528 = vrcp.pop %v486
      %v529 = vmul.f32 1.0, %v528
      %v530 = vrcp.pop %v487
      %v531 = vmul.f32 1.0, %v530
      %v532 = vrcp.pop %v488
      %v533 = vmul.f32 1.0, %v532
      %v534 = vrcp.pop %v489
      %v535 = vmul.f32 1.0, %v534
      %v536 = vrcp.pop %v490
      %v537 = vmul.f32 1.0, %v536
      %v538 = vrcp.pop %v491
      %v539 = vmul.f32 1.0, %v538
      %v540 = vrcp.pop %v492
      %v541 = vmul.f32 1.0, %v540
      %v542 = vrcp.pop %v493
      %v543 = vmul.f32 1.0, %v542
      %v544 = vrcp.pop %v494
      %v545 = vmul.f32 1.0, %v544
      %v546 = vrcp.pop %v495
      %v547 = vmul.f32 1.0, %v546
      %v548 = vrcp.pop %v496
      %v549 = vmul.f32 1.0, %v548
      %v550 = vrcp.pop %v497
      %v551 = vmul.f32 1.0, %v550
      %v552 = vrcp.pop %v498
      %v553 = vmul.f32 1.0, %v552
      %v554 = vrcp.pop %v499
      %v555 = vmul.f32 1.0, %v554
      %v556 = vrcp.pop %v500
      %v557 = vmul.f32 1.0, %v556
      %v558 = vrcp.pop %v501
      %v559 = vmul.f32 1.0, %v558
      %v560 = vrcp.pop %v502
      %v561 = vmul.f32 1.0, %v560
      %v562 = vrcp.pop %v503
      %v563 = vmul.f32 1.0, %v562
      %v564 = vrcp.pop %v504
      %v565 = vmul.f32 1.0, %v564
      %v566 = vrcp.pop %v505
      %v567 = vmul.f32 1.0, %v566
      %v568 = vrcp.pop %v506
      %v569 = vmul.f32 1.0, %v568
      %v570 = vrcp.pop %v507
      %v571 = vmul.f32 1.0, %v570
      %v572 = vmul.f32 %v348, %v509
      %v573 = vmul.f32 %v349, %v511
      %v574 = vmul.f32 %v350, %v513
      %v575 = vmul.f32 %v351, %v515
      %v576 = vmul.f32 %v352, %v517
      %v577 = vmul.f32 %v353, %v519
      %v578 = vmul.f32 %v354, %v521
      %v579 = vmul.f32 %v355, %v523
      %v580 = vmul.f32 %v356, %v525
      %v581 = vmul.f32 %v357, %v527
      %v582 = vmul.f32 %v358, %v529
      %v583 = vmul.f32 %v359, %v531
      %v584 = vmul.f32 %v360, %v533
      %v585 = vmul.f32 %v361, %v535
      %v586 = vmul.f32 %v362, %v537
      %v587 = vmul.f32 %v363, %v539
      %v588 = vmul.f32 %v364, %v541
      %v589 = vmul.f32 %v365, %v543
      %v590 = vmul.f32 %v366, %v545
      %v591 = vmul.f32 %v367, %v547
      %v592 = vmul.f32 %v368, %v549
      %v593 = vmul.f32 %v369, %v551
      %v594 = vmul.f32 %v370, %v553
      %v595 = vmul.f32 %v371, %v555
      %v596 = vmul.f32 %v372, %v557
      %v597 = vmul.f32 %v373, %v559
      %v598 = vmul.f32 %v374, %v561
      %v599 = vmul.f32 %v375, %v563
      %v600 = vmul.f32 %v376, %v565
      %v601 = vmul.f32 %v377, %v567
      %v602 = vmul.f32 %v378, %v569
      %v603 = vmul.f32 %v379, %v571
      %604 = vst [vmem:[%s236] sm:$0xff] %v572
      %605 = vst [vmem:[%s236 + $0x8] sm:$0xff] %v573
      %606 = vst [vmem:[%s236 + $0x10] sm:$0xff] %v574
      %607 = vst [vmem:[%s236 + $0x18] sm:$0xff] %v575
      %608 = vst [vmem:[%s236 + $0x20] sm:$0xff] %v576
      %609 = vst [vmem:[%s236 + $0x28] sm:$0xff] %v577
      %610 = vst [vmem:[%s236 + $0x30] sm:$0xff] %v578
      %611 = vst [vmem:[%s236 + $0x38] sm:$0xff] %v579
      %612 = vst [vmem:[%s236 + $0x40] sm:$0xff] %v580
      %613 = vst [vmem:[%s236 + $0x48] sm:$0xff] %v581
      %614 = vst [vmem:[%s236 + $0x50] sm:$0xff] %v582
      %615 = vst [vmem:[%s236 + $0x58] sm:$0xff] %v583
      %616 = vst [vmem:[%s236 + $0x60] sm:$0xff] %v584
      %617 = vst [vmem:[%s236 + $0x68] sm:$0xff] %v585
      %618 = vst [vmem:[%s236 + $0x70] sm:$0xff] %v586
      %619 = vst [vmem:[%s236 + $0x78] sm:$0xff] %v587
      %620 = vst [vmem:[%s236 + $0x80] sm:$0xff] %v588
      %621 = vst [vmem:[%s236 + $0x88] sm:$0xff] %v589
      %622 = vst [vmem:[%s236 + $0x90] sm:$0xff] %v590
      %623 = vst [vmem:[%s236 + $0x98] sm:$0xff] %v591
      %624 = vst [vmem:[%s236 + $0xa0] sm:$0xff] %v592
      %625 = vst [vmem:[%s236 + $0xa8] sm:$0xff] %v593
      %626 = vst [vmem:[%s236 + $0xb0] sm:$0xff] %v594
      %627 = vst [vmem:[%s236 + $0xb8] sm:$0xff] %v595
      %628 = vst [vmem:[%s236 + $0xc0] sm:$0xff] %v596
      %629 = vst [vmem:[%s236 + $0xc8] sm:$0xff] %v597
      %630 = vst [vmem:[%s236 + $0xd0] sm:$0xff] %v598
      %631 = vst [vmem:[%s236 + $0xd8] sm:$0xff] %v599
      %632 = vst [vmem:[%s236 + $0xe0] sm:$0xff] %v600
      %633 = vst [vmem:[%s236 + $0xe8] sm:$0xff] %v601
      %634 = vst [vmem:[%s236 + $0xf0] sm:$0xff] %v602
      %635 = vst [vmem:[%s236 + $0xf8] sm:$0xff] %v603
      %s636 = smul.u32 32, %s19
      %p637 = scmp.lt.s32.totalorder %s18, 1
      %s638 = scalar_select %p637, %s18, 1
      %p639 = scmp.lt.s32.totalorder %s636, 31
      %s640 = scalar_select %p639, %s636, 31
      %s641 = smul.addr %s638, 32
      %s642 = sadd.s32 %s640, %s641
      %s643 = smul.addr %s642, 8
      %s644 = scalar_lea.vmem %s3, %s643
      // Predicated region
      $region33: #{basic_conv_forward.7} parent=31 // pred_check
        %p645 = pneg %p126
      $region34: #{basic_conv_forward.7} parent=31 // pred_check_branch
        %647 = sbr.rel (%p645) target = $region36
      $region35: #{basic_conv_forward.7} parent=31 // pred_region
        %s648 = smul.u32 32, %s19
      $region36: #{basic_conv_forward.7} parent=31 // pred_fallthru
        _
    $region32: #{basic_conv_forward.7} parent=5 // pred_fallthru
      _
    %p649 = scmp.le.s32.totalorder 2, %s9
    // Predicated region
    $region37: #{basic_conv_forward.7} parent=5 // pred_check
      %p650 = pneg %p649
    $region38: #{basic_conv_forward.7} parent=5 // pred_check_branch
      %652 = sbr.rel (%p650) target = $region40
    $region39: #{basic_conv_forward.7} parent=5 // pred_region
      %s653 = ssub.s32 %s9, 2
      // Predicated region
      $region41: #{basic_conv_forward.7} parent=39 // pred_check
        %p654 = pneg %p132
      $region42: #{basic_conv_forward.7} parent=39 // pred_check_branch
        %656 = sbr.rel (%p654) target = $region44
      $region43: #{basic_conv_forward.7} parent=39 // pred_region
        %s657 = smul.u32 32, %s21
        %p658 = scmp.lt.s32.totalorder %s20, 1
        %s659 = scalar_select %p658, %s20, 1
        %p660 = scmp.lt.s32.totalorder %s657, 31
        %s661 = scalar_select %p660, %s657, 31
        %s662 = smul.addr %s659, 32
        %s663 = sadd.s32 %s661, %s662
        %s664 = smul.addr %s663, 8
        %s665 = scalar_lea.vmem %s3, %s664
      $region44: #{basic_conv_forward.7} parent=39 // pred_fallthru
        _
    $region40: #{basic_conv_forward.7} parent=5 // pred_fallthru
      _
  $region6: #{basic_conv_forward.7} parent=0 // loop_footer
    %s13 = sadd.s32 1, %s9
  $region7: #{basic_conv_forward.7} parent=0 // loop_footer_branch
    %8 = sbr.rel target = $region3
  $region8: #{basic_conv_forward.7} parent=0 // loop_exit
    _

</llo_original>
